<compile_context>
chip_gen: v6e
topology: v6e:2x2x1
jax: 0.10.0
libtpu: 0.0.40
codegen_flags: <defaults>
</compile_context>

<pallas_src>
import functools

import jax
import jax.numpy as jnp
from jax import lax
from jax.experimental import pallas as pl
from jax.experimental.pallas import tpu as pltpu


# ---------------------------------------------------------------------------
# Fused forward kernel (one batch tile of `bt` images per grid step, bt % 8 == 0)
# ---------------------------------------------------------------------------
def _fused_net_kernel(seed_ref, x_ref, k1_ref, b1_ref, k2_ref, b2_ref,
                      w1_ref, bf1_ref, w2_ref, bf2_ref, o_ref, *,
                      bt, droprate, training):
    f32 = jnp.float32
    cdt = k1_ref.dtype          # matmul-operand dtype (bf16 default, f32 optional)

    # ---- conv1 (1->10, 5x5, valid) as ONE stacked-K GEMM ---------------------
    # rows = (h_out, b); K lanes = (di, w_in) = 140;
    # out lanes = (j%2)*128 + (j//2)*10 + cout  (lanes 120..127 of each slab = 0)
    xparts = [x_ref[di:di + 24, :, :].reshape(24 * bt, 28) for di in range(5)]
    xcat = jnp.concatenate(xparts, axis=-1)                        # (24*bt, 140)
    acc1 = jnp.dot(xcat, k1_ref[...], preferred_element_type=f32) + b1_ref[...]

    # ---- 2x2 max-pool + relu: W = aligned 128-lane slab max, H = reshape -----
    wmax = jnp.maximum(acc1[:, 0:128], acc1[:, 128:256])           # (24*bt, 128)
    wmax = wmax.reshape(12, 2, bt, 128)
    m1 = jnp.maximum(jnp.maximum(wmax[:, 0], wmax[:, 1]), 0.0)     # (12, bt, 128)

    # ---- conv2 (10->20, 5x5, valid) as ONE stacked-K GEMM --------------------
    # K-concat offsets are multiples of 128 -> no cross-lane shuffles.
    m1c = m1.astype(cdt)
    mparts = [m1c[di:di + 8].reshape(8 * bt, 128) for di in range(5)]
    mcat = jnp.concatenate(mparts, axis=-1)                        # (8*bt, 640)
    acc2 = jnp.dot(mcat, k2_ref[...], preferred_element_type=f32) + b2_ref[...]

    wmax2 = jnp.maximum(acc2[:, 0:128], acc2[:, 128:256])          # (8*bt, 128)
    wmax2 = wmax2.reshape(4, 2, bt, 128)
    m2 = jnp.maximum(jnp.maximum(wmax2[:, 0], wmax2[:, 1]), 0.0)   # (4, bt, 128)

    # ---- flatten (128-aligned concat) + fc1 + relu + dropout -----------------
    flat = jnp.concatenate([m2[0], m2[1], m2[2], m2[3]], axis=-1).astype(cdt)
    z = jnp.dot(flat, w1_ref[...], preferred_element_type=f32) + bf1_ref[...]
    z = jnp.maximum(z, 0.0)                                        # (bt, 50)
    if training and droprate > 0.0:
        # TODO(synk): dropout mask comes from an in-kernel stateless integer
        # hash; keep-probability and 1/(1-p) scaling match F.dropout, but the
        # random stream differs from torch's RNG.
        row = lax.broadcasted_iota(jnp.int32, z.shape, 0).astype(jnp.uint32)
        col = lax.broadcasted_iota(jnp.int32, z.shape, 1).astype(jnp.uint32)
        tile = pl.program_id(0).astype(jnp.uint32)
        h = (seed_ref[0].astype(jnp.uint32)
             + tile * jnp.uint32(0x9E3779B9)
             + row * jnp.uint32(0x85EBCA6B)
             + col * jnp.uint32(0xC2B2AE35))
        h = h ^ (h >> 16)
        h = h * jnp.uint32(0x7FEB352D)
        h = h ^ (h >> 15)
        h = h * jnp.uint32(0x846CA68B)
        h = h ^ (h >> 16)
        thresh = jnp.uint32(min(int(round(droprate * 4294967296.0)), 4294967295))
        keep = h >= thresh
        z = jnp.where(keep, z * jnp.float32(1.0 / (1.0 - droprate)),
                      jnp.float32(0.0))

    # ---- fc2 (f32, tiny) + log_softmax over a lane-dense 128-wide slab -------
    # Pad columns have zero weights and a -1e30 bias, so exp() underflows to 0
    # and they never influence the 10 real log-probs; host slices [:, :10].
    y = jnp.dot(z, w2_ref[...], preferred_element_type=f32) + bf2_ref[...]
    y_max = jnp.max(y, axis=-1, keepdims=True)
    s = y - y_max
    lse = jnp.log(jnp.sum(jnp.exp(s), axis=-1, keepdims=True))
    o_ref[...] = s - lse


# ---------------------------------------------------------------------------
# One-time host-side weight preparation (done at init, NOT per forward)
# ---------------------------------------------------------------------------
def prepare_params(params, compute_dtype=jnp.bfloat16):
    """Banded conv weights + permuted/padded fc weights for the fused kernel.

    Matmul operands are stored in `compute_dtype` (bf16 by default); biases and
    the tiny fc2 stay f32 so VPU math and log_softmax are f32 everywhere.
    """
    w1, b1 = params["conv1_w"], params["conv1_b"]     # (10,1,5,5), (10,)
    w2, b2 = params["conv2_w"], params["conv2_b"]     # (20,10,5,5), (20,)
    f1w, f1b = params["fc1_w"], params["fc1_b"]       # (50,320), (50,)
    f2w, f2b = params["fc2_w"], params["fc2_b"]       # (10,50), (10,)

    def banded(w, in_w, in_lane, out_w, out_lane):
        # w: (cout, cin, 5, 5). Returns (5*in_lane, 2*out_lane):
        #   row = di*in_lane + (w_in*cin + ci)         (pad rows are 0)
        #   col = (j%2)*out_lane + (j//2)*cout + co    (pad cols are 0)
        cout, cin = w.shape[0], w.shape[1]
        ow2 = out_w // 2
        wt = jnp.transpose(w, (2, 3, 1, 0))                       # (di, kw, ci, co)
        j = 2 * jnp.arange(ow2)[None, :] + jnp.arange(2)[:, None]  # (2, ow2)
        kw = jnp.arange(in_w)[:, None, None] - j[None, :, :]       # (in_w, 2, ow2)
        valid = (kw >= 0) & (kw <= 4)
        t = wt[:, jnp.clip(kw, 0, 4), :, :]                # (5, in_w, 2, ow2, ci, co)
        t = jnp.where(valid[None, :, :, :, None, None], t, 0.0)
        t = jnp.transpose(t, (0, 1, 4, 2, 3, 5))           # (5, in_w, ci, 2, ow2, co)
        t = t.reshape(5, in_w * cin, 2, ow2 * cout)
        t = jnp.pad(t, ((0, 0), (0, in_lane - in_w * cin),
                        (0, 0), (0, out_lane - ow2 * cout)))
        return t.reshape(5 * in_lane, 2 * out_lane)

    def padded_bias(b, reps, out_lane):
        slab = jnp.pad(jnp.tile(b, reps), (0, out_lane - reps * b.shape[0]))
        return jnp.concatenate([slab, slab]).reshape(1, 2 * out_lane)

    k1 = banded(w1, in_w=28, in_lane=28, out_w=24, out_lane=128)    # (140, 256)
    k2 = banded(w2, in_w=12, in_lane=128, out_w=8, out_lane=128)    # (640, 256)
    b1t = padded_bias(b1, 12, 128)                                  # (1, 256)
    b2t = padded_bias(b2, 4, 128)                                   # (1, 256)

    # fc1: kernel flat lane order is (h, w*20 + c), padded to 128 lanes per h.
    w1perm = jnp.transpose(f1w.reshape(50, 20, 4, 4), (2, 3, 1, 0))  # (h, w, c, out)
    w1r = jnp.pad(w1perm.reshape(4, 80, 50), ((0, 0), (0, 48), (0, 0)))
    w1r = w1r.reshape(512, 50)

    # fc2: lane-dense 128-wide output; pad cols get zero weight + -1e30 bias.
    w2p = jnp.pad(f2w.T, ((0, 0), (0, 118)))                         # (50, 128)
    bf2p = jnp.full((1, 128), -1e30, jnp.float32).at[0, :10].set(f2b)

    cdt = compute_dtype
    return dict(k1=k1.astype(cdt), b1=b1t.astype(jnp.float32),
                k2=k2.astype(cdt), b2=b2t.astype(jnp.float32),
                w1=w1r.astype(cdt), bf1=f1b.reshape(1, 50).astype(jnp.float32),
                w2=w2p.astype(jnp.float32), bf2=bf2p.astype(jnp.float32))


def _round_up(n, m):
    return ((n + m - 1) // m) * m


# ---------------------------------------------------------------------------
# Forward pass (single fused pallas_call)
# ---------------------------------------------------------------------------
@functools.partial(jax.jit, static_argnames=("droprate", "training", "block_b"))
def net_forward(prep, x, seed=0, *, droprate=0.5, training=True, block_b=128):
    """x: (B, 1, 28, 28) float32 NCHW -> (B, 10) log-probabilities."""
    assert block_b % 8 == 0
    B = x.shape[0]
    bt = min(block_b, _round_up(B, 8))       # don't over-pad tiny batches
    bp = _round_up(B, bt)
    cdt = prep["k1"].dtype

    # (B,1,28,28) -> (H=28, B, W=28); pad batch to a multiple of the tile size.
    xt = jnp.transpose(x.reshape(B, 28, 28), (1, 0, 2)).astype(cdt)
    if bp != B:
        xt = jnp.pad(xt, ((0, 0), (0, bp - B), (0, 0)))
    seed_arr = jnp.reshape(jnp.asarray(seed, dtype=jnp.int32), (1,))

    kernel = functools.partial(_fused_net_kernel, bt=bt,
                               droprate=float(droprate), training=bool(training))
    grid_spec = pltpu.PrefetchScalarGridSpec(
        num_scalar_prefetch=1,
        grid=(bp // bt,),
        in_specs=[
            pl.BlockSpec((28, bt, 28), lambda i, s: (0, i, 0)),     # input tile
            # Constant-index weight blocks stay resident in VMEM across tiles.
            pl.BlockSpec((140, 256), lambda i, s: (0, 0)),          # conv1 banded
            pl.BlockSpec((1, 256), lambda i, s: (0, 0)),
            pl.BlockSpec((640, 256), lambda i, s: (0, 0)),          # conv2 banded
            pl.BlockSpec((1, 256), lambda i, s: (0, 0)),
            pl.BlockSpec((512, 50), lambda i, s: (0, 0)),           # fc1
            pl.BlockSpec((1, 50), lambda i, s: (0, 0)),
            pl.BlockSpec((50, 128), lambda i, s: (0, 0)),           # fc2 (f32)
            pl.BlockSpec((1, 128), lambda i, s: (0, 0)),
        ],
        out_specs=pl.BlockSpec((bt, 128), lambda i, s: (i, 0)),     # lane-dense
    )

    itemsize = jnp.dtype(cdt).itemsize
    flops = 2 * bp * (24 * 140 * 256 + 8 * 640 * 256 + 512 * 50 + 50 * 128)
    bytes_accessed = (28 * bp * 28 * itemsize + bp * 128 * 4
                      + sum(int(v.size) * v.dtype.itemsize for v in prep.values()))
    cost = pl.CostEstimate(flops=flops, transcendentals=129 * bp,
                           bytes_accessed=bytes_accessed)

    out = pl.pallas_call(
        kernel,
        out_shape=jax.ShapeDtypeStruct((bp, 128), jnp.float32),
        grid_spec=grid_spec,
        compiler_params=pltpu.CompilerParams(
            dimension_semantics=("parallel",)),   # batch tiles -> 2 TCs on v7x
        cost_estimate=cost,
    )(seed_arr, xt, prep["k1"], prep["b1"], prep["k2"], prep["b2"],
      prep["w1"], prep["bf1"], prep["w2"], prep["bf2"])
    return out[:B, :10]


# ---------------------------------------------------------------------------
# Parameter init (PyTorch default-style) and a pure-JAX reference for checking
# ---------------------------------------------------------------------------
def init_params(key):
    ks = jax.random.split(key, 8)

    def uni(k, shape, fan_in):
        bound = 1.0 / (fan_in ** 0.5)
        return jax.random.uniform(k, shape, jnp.float32, -bound, bound)

    return dict(
        conv1_w=uni(ks[0], (10, 1, 5, 5), 1 * 5 * 5),
        conv1_b=uni(ks[1], (10,), 1 * 5 * 5),
        conv2_w=uni(ks[2], (20, 10, 5, 5), 10 * 5 * 5),
        conv2_b=uni(ks[3], (20,), 10 * 5 * 5),
        fc1_w=uni(ks[4], (50, 320), 320),
        fc1_b=uni(ks[5], (50,), 320),
        fc2_w=uni(ks[6], (10, 50), 50),
        fc2_b=uni(ks[7], (10,), 50),
    )


def _reference_forward(params, x):
    dn = ("NCHW", "OIHW", "NCHW")
    y = lax.conv_general_dilated(x, params["conv1_w"], (1, 1), "VALID",
                                 dimension_numbers=dn)
    y = y + params["conv1_b"].reshape(1, -1, 1, 1)
    y = lax.reduce_window(y, -jnp.inf, lax.max, (1, 1, 2, 2), (1, 1, 2, 2), "VALID")
    y = jnp.maximum(y, 0.0)
    y = lax.conv_general_dilated(y, params["conv2_w"], (1, 1), "VALID",
                                 dimension_numbers=dn)
    y = y + params["conv2_b"].reshape(1, -1, 1, 1)
    y = lax.reduce_window(y, -jnp.inf, lax.max, (1, 1, 2, 2), (1, 1, 2, 2), "VALID")
    y = jnp.maximum(y, 0.0)
    y = y.reshape(y.shape[0], -1)                             # (B, 320), (C,H,W)
    y = jnp.maximum(y @ params["fc1_w"].T + params["fc1_b"], 0.0)
    y = y @ params["fc2_w"].T + params["fc2_b"]
    return jax.nn.log_softmax(y, axis=-1)


if __name__ == "__main__":
    key = jax.random.PRNGKey(0)
    pkey, xkey = jax.random.split(key)
    params = init_params(pkey)
    x = jax.random.normal(xkey, (2, 1, 28, 28), dtype=jnp.float32)
    ref = jax.block_until_ready(_reference_forward(params, x))

    # 1) f32 compute path, eval mode: tight match against pure-JAX reference.
    prep32 = prepare_params(params, compute_dtype=jnp.float32)
    out32 = jax.block_until_ready(net_forward(prep32, x, 0, training=False))
    assert out32.shape == (2, 10), out32.shape
    err32 = float(jnp.max(jnp.abs(out32 - ref)))
    assert err32 < 3e-3, f"f32 path max abs error vs reference: {err32}"

    # 2) bf16 matmul operands (default, v6e/v7x-friendly), eval mode.
    prep16 = prepare_params(params)
    out16 = jax.block_until_ready(net_forward(prep16, x, 0, training=False))
    assert out16.shape == (2, 10), out16.shape
    err16 = float(jnp.max(jnp.abs(out16 - ref)))
    assert err16 < 5e-2, f"bf16 path max abs error vs reference: {err16}"

    # 3) training mode (fused in-kernel dropout) on a batch that exercises the
    #    128-image tile and a multi-tile ("parallel") grid.
    xb = jax.random.normal(xkey, (256, 1, 28, 28), dtype=jnp.float32)
    outb = jax.block_until_ready(net_forward(prep16, xb, 123,
                                             droprate=0.5, training=True))
    assert outb.shape == (256, 10), outb.shape
    assert bool(jnp.all(jnp.isfinite(outb)))
    row_sums = jnp.exp(outb).sum(axis=1)
    assert bool(jnp.all(jnp.abs(row_sums - 1.0) < 1e-3))

    print("KERNEL_OK")
</pallas_src>

<mosaic_0001>
module attributes {stable_mosaic.version = 11 : i64} {
  func.func @_fused_net_kernel(%arg0: i32, %arg1: memref<1xi32, #tpu.memory_space<smem>>, %arg2: memref<28x8x28xf32, #tpu.memory_space<vmem>>, %arg3: memref<140x256xf32, #tpu.memory_space<vmem>>, %arg4: memref<1x256xf32, #tpu.memory_space<vmem>>, %arg5: memref<640x256xf32, #tpu.memory_space<vmem>>, %arg6: memref<1x256xf32, #tpu.memory_space<vmem>>, %arg7: memref<512x50xf32, #tpu.memory_space<vmem>>, %arg8: memref<1x50xf32, #tpu.memory_space<vmem>>, %arg9: memref<50x128xf32, #tpu.memory_space<vmem>>, %arg10: memref<1x128xf32, #tpu.memory_space<vmem>>, %arg11: memref<8x128xf32, #tpu.memory_space<vmem>>) attributes {dimension_semantics = [#tpu.dimension_semantics<parallel>], iteration_bounds = array<i64: 1>, scalar_prefetch = 1 : i64, scratch_operands = 0 : i64, tpu.core_type = #tpu.core_type<tc>, window_params = [{transform_indices = @transform_0, window_bounds = array<i64: 28, 8, 28>}, {pipeline_mode = #tpu.pipeline_mode<synchronous>, transform_indices = @transform_1, window_bounds = array<i64: 140, 256>}, {pipeline_mode = #tpu.pipeline_mode<synchronous>, transform_indices = @transform_2, window_bounds = array<i64: 1, 256>}, {pipeline_mode = #tpu.pipeline_mode<synchronous>, transform_indices = @transform_3, window_bounds = array<i64: 640, 256>}, {pipeline_mode = #tpu.pipeline_mode<synchronous>, transform_indices = @transform_4, window_bounds = array<i64: 1, 256>}, {pipeline_mode = #tpu.pipeline_mode<synchronous>, transform_indices = @transform_5, window_bounds = array<i64: 512, 50>}, {pipeline_mode = #tpu.pipeline_mode<synchronous>, transform_indices = @transform_6, window_bounds = array<i64: 1, 50>}, {pipeline_mode = #tpu.pipeline_mode<synchronous>, transform_indices = @transform_7, window_bounds = array<i64: 50, 128>}, {pipeline_mode = #tpu.pipeline_mode<synchronous>, transform_indices = @transform_8, window_bounds = array<i64: 1, 128>}, {transform_indices = @transform_9, window_bounds = array<i64: 8, 128>}]} {
    %c0 = arith.constant 0 : index
    %c0_0 = arith.constant 0 : index
    %c0_1 = arith.constant 0 : index
    %0 = vector.load %arg2[%c0, %c0_0, %c0_1] : memref<28x8x28xf32, #tpu.memory_space<vmem>>, vector<24x8x28xf32>
    %1 = vector.shape_cast %0 : vector<24x8x28xf32> to vector<192x28xf32>
    %c1 = arith.constant 1 : index
    %c0_2 = arith.constant 0 : index
    %c0_3 = arith.constant 0 : index
    %2 = vector.load %arg2[%c1, %c0_2, %c0_3] : memref<28x8x28xf32, #tpu.memory_space<vmem>>, vector<24x8x28xf32>
    %3 = vector.shape_cast %2 : vector<24x8x28xf32> to vector<192x28xf32>
    %c2 = arith.constant 2 : index
    %c0_4 = arith.constant 0 : index
    %c0_5 = arith.constant 0 : index
    %4 = vector.load %arg2[%c2, %c0_4, %c0_5] : memref<28x8x28xf32, #tpu.memory_space<vmem>>, vector<24x8x28xf32>
    %5 = vector.shape_cast %4 : vector<24x8x28xf32> to vector<192x28xf32>
    %c3 = arith.constant 3 : index
    %c0_6 = arith.constant 0 : index
    %c0_7 = arith.constant 0 : index
    %6 = vector.load %arg2[%c3, %c0_6, %c0_7] : memref<28x8x28xf32, #tpu.memory_space<vmem>>, vector<24x8x28xf32>
    %7 = vector.shape_cast %6 : vector<24x8x28xf32> to vector<192x28xf32>
    %c4 = arith.constant 4 : index
    %c0_8 = arith.constant 0 : index
    %c0_9 = arith.constant 0 : index
    %8 = vector.load %arg2[%c4, %c0_8, %c0_9] : memref<28x8x28xf32, #tpu.memory_space<vmem>>, vector<24x8x28xf32>
    %9 = vector.shape_cast %8 : vector<24x8x28xf32> to vector<192x28xf32>
    %10 = tpu.concatenate %1, %3, %5, %7, %9 in 1 : vector<192x28xf32>, vector<192x28xf32>, vector<192x28xf32>, vector<192x28xf32>, vector<192x28xf32> -> vector<192x140xf32>
    %c0_10 = arith.constant 0 : index
    %c0_11 = arith.constant 0 : index
    %11 = vector.load %arg3[%c0_10, %c0_11] : memref<140x256xf32, #tpu.memory_space<vmem>>, vector<140x256xf32>
    %cst = arith.constant dense<0.000000e+00> : vector<192x256xf32>
    %12 = tpu.matmul %10, %11, %cst {dimension_numbers = #tpu.dot_dimension_numbers<[1], [0], [0], [1], [0, 0, 1, 1], [], []>} : vector<192x140xf32>, vector<140x256xf32>, vector<192x256xf32> -> vector<192x256xf32>
    %c0_12 = arith.constant 0 : index
    %c0_13 = arith.constant 0 : index
    %13 = vector.load %arg4[%c0_12, %c0_13] : memref<1x256xf32, #tpu.memory_space<vmem>>, vector<1x256xf32>
    %14 = vector.broadcast %13 : vector<1x256xf32> to vector<192x256xf32>
    %15 = arith.addf %12, %14 : vector<192x256xf32>
    %16 = vector.extract_strided_slice %15 {offsets = [0, 0], sizes = [192, 128], strides = [1, 1]} : vector<192x256xf32> to vector<192x128xf32>
    %17 = vector.extract_strided_slice %15 {offsets = [0, 128], sizes = [192, 128], strides = [1, 1]} : vector<192x256xf32> to vector<192x128xf32>
    %18 = arith.maximumf %16, %17 : vector<192x128xf32>
    %19 = vector.shape_cast %18 : vector<192x128xf32> to vector<12x2x8x128xf32>
    %20 = vector.extract_strided_slice %19 {offsets = [0, 0, 0, 0], sizes = [12, 1, 8, 128], strides = [1, 1, 1, 1]} : vector<12x2x8x128xf32> to vector<12x1x8x128xf32>
    %21 = vector.shape_cast %20 : vector<12x1x8x128xf32> to vector<12x8x128xf32>
    %22 = vector.extract_strided_slice %19 {offsets = [0, 1, 0, 0], sizes = [12, 1, 8, 128], strides = [1, 1, 1, 1]} : vector<12x2x8x128xf32> to vector<12x1x8x128xf32>
    %23 = vector.shape_cast %22 : vector<12x1x8x128xf32> to vector<12x8x128xf32>
    %24 = arith.maximumf %21, %23 : vector<12x8x128xf32>
    %cst_14 = arith.constant 0.000000e+00 : f32
    %25 = vector.broadcast %cst_14 : f32 to vector<12x8x128xf32>
    %26 = arith.maximumf %24, %25 : vector<12x8x128xf32>
    %27 = vector.extract_strided_slice %26 {offsets = [0, 0, 0], sizes = [8, 8, 128], strides = [1, 1, 1]} : vector<12x8x128xf32> to vector<8x8x128xf32>
    %28 = vector.shape_cast %27 : vector<8x8x128xf32> to vector<64x128xf32>
    %29 = vector.extract_strided_slice %26 {offsets = [1, 0, 0], sizes = [8, 8, 128], strides = [1, 1, 1]} : vector<12x8x128xf32> to vector<8x8x128xf32>
    %30 = vector.shape_cast %29 : vector<8x8x128xf32> to vector<64x128xf32>
    %31 = vector.extract_strided_slice %26 {offsets = [2, 0, 0], sizes = [8, 8, 128], strides = [1, 1, 1]} : vector<12x8x128xf32> to vector<8x8x128xf32>
    %32 = vector.shape_cast %31 : vector<8x8x128xf32> to vector<64x128xf32>
    %33 = vector.extract_strided_slice %26 {offsets = [3, 0, 0], sizes = [8, 8, 128], strides = [1, 1, 1]} : vector<12x8x128xf32> to vector<8x8x128xf32>
    %34 = vector.shape_cast %33 : vector<8x8x128xf32> to vector<64x128xf32>
    %35 = vector.extract_strided_slice %26 {offsets = [4, 0, 0], sizes = [8, 8, 128], strides = [1, 1, 1]} : vector<12x8x128xf32> to vector<8x8x128xf32>
    %36 = vector.shape_cast %35 : vector<8x8x128xf32> to vector<64x128xf32>
    %37 = tpu.concatenate %28, %30, %32, %34, %36 in 1 : vector<64x128xf32>, vector<64x128xf32>, vector<64x128xf32>, vector<64x128xf32>, vector<64x128xf32> -> vector<64x640xf32>
    %c0_15 = arith.constant 0 : index
    %c0_16 = arith.constant 0 : index
    %38 = vector.load %arg5[%c0_15, %c0_16] : memref<640x256xf32, #tpu.memory_space<vmem>>, vector<640x256xf32>
    %cst_17 = arith.constant dense<0.000000e+00> : vector<64x256xf32>
    %39 = tpu.matmul %37, %38, %cst_17 {dimension_numbers = #tpu.dot_dimension_numbers<[1], [0], [0], [1], [0, 0, 1, 1], [], []>} : vector<64x640xf32>, vector<640x256xf32>, vector<64x256xf32> -> vector<64x256xf32>
    %c0_18 = arith.constant 0 : index
    %c0_19 = arith.constant 0 : index
    %40 = vector.load %arg6[%c0_18, %c0_19] : memref<1x256xf32, #tpu.memory_space<vmem>>, vector<1x256xf32>
    %41 = vector.broadcast %40 : vector<1x256xf32> to vector<64x256xf32>
    %42 = arith.addf %39, %41 : vector<64x256xf32>
    %43 = vector.extract_strided_slice %42 {offsets = [0, 0], sizes = [64, 128], strides = [1, 1]} : vector<64x256xf32> to vector<64x128xf32>
    %44 = vector.extract_strided_slice %42 {offsets = [0, 128], sizes = [64, 128], strides = [1, 1]} : vector<64x256xf32> to vector<64x128xf32>
    %45 = arith.maximumf %43, %44 : vector<64x128xf32>
    %46 = vector.shape_cast %45 : vector<64x128xf32> to vector<4x2x8x128xf32>
    %47 = vector.extract_strided_slice %46 {offsets = [0, 0, 0, 0], sizes = [4, 1, 8, 128], strides = [1, 1, 1, 1]} : vector<4x2x8x128xf32> to vector<4x1x8x128xf32>
    %48 = vector.shape_cast %47 : vector<4x1x8x128xf32> to vector<4x8x128xf32>
    %49 = vector.extract_strided_slice %46 {offsets = [0, 1, 0, 0], sizes = [4, 1, 8, 128], strides = [1, 1, 1, 1]} : vector<4x2x8x128xf32> to vector<4x1x8x128xf32>
    %50 = vector.shape_cast %49 : vector<4x1x8x128xf32> to vector<4x8x128xf32>
    %51 = arith.maximumf %48, %50 : vector<4x8x128xf32>
    %cst_20 = arith.constant 0.000000e+00 : f32
    %52 = vector.broadcast %cst_20 : f32 to vector<4x8x128xf32>
    %53 = arith.maximumf %51, %52 : vector<4x8x128xf32>
    %54 = vector.extract_strided_slice %53 {offsets = [0, 0, 0], sizes = [1, 8, 128], strides = [1, 1, 1]} : vector<4x8x128xf32> to vector<1x8x128xf32>
    %55 = vector.shape_cast %54 : vector<1x8x128xf32> to vector<8x128xf32>
    %56 = vector.extract_strided_slice %53 {offsets = [1, 0, 0], sizes = [1, 8, 128], strides = [1, 1, 1]} : vector<4x8x128xf32> to vector<1x8x128xf32>
    %57 = vector.shape_cast %56 : vector<1x8x128xf32> to vector<8x128xf32>
    %58 = vector.extract_strided_slice %53 {offsets = [2, 0, 0], sizes = [1, 8, 128], strides = [1, 1, 1]} : vector<4x8x128xf32> to vector<1x8x128xf32>
    %59 = vector.shape_cast %58 : vector<1x8x128xf32> to vector<8x128xf32>
    %60 = vector.extract_strided_slice %53 {offsets = [3, 0, 0], sizes = [1, 8, 128], strides = [1, 1, 1]} : vector<4x8x128xf32> to vector<1x8x128xf32>
    %61 = vector.shape_cast %60 : vector<1x8x128xf32> to vector<8x128xf32>
    %62 = tpu.concatenate %55, %57, %59, %61 in 1 : vector<8x128xf32>, vector<8x128xf32>, vector<8x128xf32>, vector<8x128xf32> -> vector<8x512xf32>
    %c0_21 = arith.constant 0 : index
    %c0_22 = arith.constant 0 : index
    %63 = vector.load %arg7[%c0_21, %c0_22] : memref<512x50xf32, #tpu.memory_space<vmem>>, vector<512x50xf32>
    %cst_23 = arith.constant dense<0.000000e+00> : vector<8x50xf32>
    %64 = tpu.matmul %62, %63, %cst_23 {dimension_numbers = #tpu.dot_dimension_numbers<[1], [0], [0], [1], [0, 0, 1, 1], [], []>} : vector<8x512xf32>, vector<512x50xf32>, vector<8x50xf32> -> vector<8x50xf32>
    %c0_24 = arith.constant 0 : index
    %c0_25 = arith.constant 0 : index
    %65 = vector.load %arg8[%c0_24, %c0_25] : memref<1x50xf32, #tpu.memory_space<vmem>>, vector<1x50xf32>
    %66 = vector.broadcast %65 : vector<1x50xf32> to vector<8x50xf32>
    %67 = arith.addf %64, %66 : vector<8x50xf32>
    %cst_26 = arith.constant 0.000000e+00 : f32
    %68 = vector.broadcast %cst_26 : f32 to vector<8x50xf32>
    %69 = arith.maximumf %67, %68 : vector<8x50xf32>
    %c0_27 = arith.constant 0 : index
    %c0_28 = arith.constant 0 : index
    %70 = vector.load %arg9[%c0_27, %c0_28] : memref<50x128xf32, #tpu.memory_space<vmem>>, vector<50x128xf32>
    %cst_29 = arith.constant dense<0.000000e+00> : vector<8x128xf32>
    %71 = tpu.matmul %69, %70, %cst_29 {dimension_numbers = #tpu.dot_dimension_numbers<[1], [0], [0], [1], [0, 0, 1, 1], [], []>} : vector<8x50xf32>, vector<50x128xf32>, vector<8x128xf32> -> vector<8x128xf32>
    %c0_30 = arith.constant 0 : index
    %c0_31 = arith.constant 0 : index
    %72 = vector.load %arg10[%c0_30, %c0_31] : memref<1x128xf32, #tpu.memory_space<vmem>>, vector<1x128xf32>
    %73 = vector.broadcast %72 : vector<1x128xf32> to vector<8x128xf32>
    %74 = arith.addf %71, %73 : vector<8x128xf32>
    %cst_32 = arith.constant dense<0xFF800000> : vector<8xf32>
    %75 = vector.multi_reduction <maximumf>, %74, %cst_32 [1] : vector<8x128xf32> to vector<8xf32>
    %76 = vector.shape_cast %75 : vector<8xf32> to vector<8x1xf32>
    %77 = vector.broadcast %76 : vector<8x1xf32> to vector<8x128xf32>
    %78 = arith.subf %74, %77 : vector<8x128xf32>
    %79 = math.exp %78 : vector<8x128xf32>
    %cst_33 = arith.constant dense<0.000000e+00> : vector<8xf32>
    %80 = vector.multi_reduction <add>, %79, %cst_33 [1] : vector<8x128xf32> to vector<8xf32>
    %81 = vector.shape_cast %80 : vector<8xf32> to vector<8x1xf32>
    %82 = math.log %81 : vector<8x1xf32>
    %83 = vector.broadcast %82 : vector<8x1xf32> to vector<8x128xf32>
    %84 = arith.subf %78, %83 : vector<8x128xf32>
    %c0_34 = arith.constant 0 : index
    %c0_35 = arith.constant 0 : index
    %85 = vector.load %arg11[%c0_34, %c0_35] : memref<8x128xf32, #tpu.memory_space<vmem>>, vector<8x128xf32>
    tpu.vector_store %arg11[%c0_34, %c0_35], %84 {strides = array<i32>} : memref<8x128xf32, #tpu.memory_space<vmem>>, vector<8x128xf32>,
    return
  }
  func.func @transform_0(%arg0: i32, %arg1: memref<1xi32, #tpu.memory_space<smem>>) -> (i32, i32, i32) {
    %c0_i32 = arith.constant 0 : i32
    %c0_i32_0 = arith.constant 0 : i32
    %c0_i32_1 = arith.constant 0 : i32
    return %c0_i32, %arg0, %c0_i32_0 : i32, i32, i32
  }
  func.func @transform_1(%arg0: i32, %arg1: memref<1xi32, #tpu.memory_space<smem>>) -> (i32, i32) {
    %c0_i32 = arith.constant 0 : i32
    %c0_i32_0 = arith.constant 0 : i32
    %c0_i32_1 = arith.constant 0 : i32
    return %c0_i32, %c0_i32_0 : i32, i32
  }
  func.func @transform_2(%arg0: i32, %arg1: memref<1xi32, #tpu.memory_space<smem>>) -> (i32, i32) {
    %c0_i32 = arith.constant 0 : i32
    %c0_i32_0 = arith.constant 0 : i32
    %c0_i32_1 = arith.constant 0 : i32
    return %c0_i32, %c0_i32_0 : i32, i32
  }
  func.func @transform_3(%arg0: i32, %arg1: memref<1xi32, #tpu.memory_space<smem>>) -> (i32, i32) {
    %c0_i32 = arith.constant 0 : i32
    %c0_i32_0 = arith.constant 0 : i32
    %c0_i32_1 = arith.constant 0 : i32
    return %c0_i32, %c0_i32_0 : i32, i32
  }
  func.func @transform_4(%arg0: i32, %arg1: memref<1xi32, #tpu.memory_space<smem>>) -> (i32, i32) {
    %c0_i32 = arith.constant 0 : i32
    %c0_i32_0 = arith.constant 0 : i32
    %c0_i32_1 = arith.constant 0 : i32
    return %c0_i32, %c0_i32_0 : i32, i32
  }
  func.func @transform_5(%arg0: i32, %arg1: memref<1xi32, #tpu.memory_space<smem>>) -> (i32, i32) {
    %c0_i32 = arith.constant 0 : i32
    %c0_i32_0 = arith.constant 0 : i32
    %c0_i32_1 = arith.constant 0 : i32
    return %c0_i32, %c0_i32_0 : i32, i32
  }
  func.func @transform_6(%arg0: i32, %arg1: memref<1xi32, #tpu.memory_space<smem>>) -> (i32, i32) {
    %c0_i32 = arith.constant 0 : i32
    %c0_i32_0 = arith.constant 0 : i32
    %c0_i32_1 = arith.constant 0 : i32
    return %c0_i32, %c0_i32_0 : i32, i32
  }
  func.func @transform_7(%arg0: i32, %arg1: memref<1xi32, #tpu.memory_space<smem>>) -> (i32, i32) {
    %c0_i32 = arith.constant 0 : i32
    %c0_i32_0 = arith.constant 0 : i32
    %c0_i32_1 = arith.constant 0 : i32
    return %c0_i32, %c0_i32_0 : i32, i32
  }
  func.func @transform_8(%arg0: i32, %arg1: memref<1xi32, #tpu.memory_space<smem>>) -> (i32, i32) {
    %c0_i32 = arith.constant 0 : i32
    %c0_i32_0 = arith.constant 0 : i32
    %c0_i32_1 = arith.constant 0 : i32
    return %c0_i32, %c0_i32_0 : i32, i32
  }
  func.func @transform_9(%arg0: i32, %arg1: memref<1xi32, #tpu.memory_space<smem>>) -> (i32, i32) {
    %c0_i32 = arith.constant 0 : i32
    %c0_i32_0 = arith.constant 0 : i32
    return %arg0, %c0_i32 : i32, i32
  }
}

</mosaic_0001>

<llo_original>
// kernel: net_forward.1
$region0: #{net_forward.1}
  #allocation0 [shape = 'u32[]', space=smem, size = 0x4, offset = 0x4, fixed_abs, tag = 'smem constant byte address 0x4 - core index']
  #allocation1 [shape = 'u32[144,128]{1,0:T(1,128)}', space=vmem, size = 0x12000, scoped, tag = 'internal scratch']
  #allocation2 [shape = 's32[1]{0}', space=sflag, size = 0x4, scoped, tag = 'scoped memory for net_forward.1']
  #allocation3 [shape = 's32[1]{0:T(128)S(6)}', space=smem, size = 0x200, scoped, tag = 'prefetched SMEM operand 0']
  %s0 = inlined_call_operand.<no memory space> [shape: s32[1], index: 0, kind: input, shape index: {}]
  %s1 = inlined_call_operand.vmem [shape: f32[28,8,28], index: 1, kind: input, shape index: {}]
  %s2 = inlined_call_operand.vmem [shape: f32[140,256], index: 2, kind: input, shape index: {}]
  %s3 = inlined_call_operand.vmem [shape: f32[1,256], index: 3, kind: input, shape index: {}]
  %s4 = inlined_call_operand.hbm [shape: f32[640,256], index: 4, kind: input, shape index: {}]
  %s5 = inlined_call_operand.vmem [shape: f32[1,256], index: 5, kind: input, shape index: {}]
  %s6 = inlined_call_operand.vmem [shape: f32[512,50], index: 6, kind: input, shape index: {}]
  %s7 = inlined_call_operand.vmem [shape: f32[1,50], index: 7, kind: input, shape index: {}]
  %s8 = inlined_call_operand.vmem [shape: f32[50,128], index: 8, kind: input, shape index: {}]
  %s9 = inlined_call_operand.vmem [shape: f32[1,128], index: 9, kind: input, shape index: {}]
  %s10 = inlined_call_operand.vmem [shape: f32[8,128], index: 10, kind: output, shape index: {}]
  %s11 = sld [smem:[#allocation0]]
  $region50: #{net_forward.1} parent=0
    _
  %s13 = ssub.s32 1, %s11
  %s14 = scalar_select 0, %s13, %s11
  %15 = sst [smem:[#allocation3]] %s0
  $region1: #{net_forward.1} parent=0
    #allocation4 [shape = 'u8[655360]{0}', space=vmem, size = 0xa0000, scoped, tag = 'input window, operand 4, single buffered']
    #allocation5 [shape = 's32[1]{0}', space=sflag, size = 0x4, scoped, tag = 'scoped memory for net_forward.1']
    %16 = vsyncpa [#allocation5], 0
    // Predicated region
    $region2: #{net_forward.1} parent=1 // pred_check
      _
    $region3: #{net_forward.1} parent=1 // pred_check_branch
      %18 = sbr.rel (0) target = $region5
    $region4: #{net_forward.1} parent=1 // pred_region
      _
    $region5: #{net_forward.1} parent=1 // pred_fallthru
      _
    // Predicated region
    $region6: #{net_forward.1} parent=1 // pred_check
      _
    $region7: #{net_forward.1} parent=1 // pred_check_branch
      %20 = sbr.rel (0) target = $region9
    $region8: #{net_forward.1} parent=1 // pred_region
      _
    $region9: #{net_forward.1} parent=1 // pred_fallthru
      _
    // Predicated region
    $region10: #{net_forward.1} parent=1 // pred_check
      _
    $region11: #{net_forward.1} parent=1 // pred_check_branch
      %22 = sbr.rel (0) target = $region13
    $region12: #{net_forward.1} parent=1 // pred_region
      _
    $region13: #{net_forward.1} parent=1 // pred_fallthru
      _
    // Predicated region
    $region14: #{net_forward.1} parent=1 // pred_check
      _
    $region15: #{net_forward.1} parent=1 // pred_check_branch
      %24 = sbr.rel (0) target = $region17
    $region16: #{net_forward.1} parent=1 // pred_region
      %s26 = ssub.s32 20480, 20480
      %27 = vsyncadd [#allocation5], %s26
      %s28 = sshll.u32 [#allocation4], 4
      %s29 = int_to_ptr.vmem [resolvable:$true] %s28
      %34 = dma.hbm_to_vmem [thread:$0]  %s4, 20480, %s29, [#allocation5], 256, 256, 16
    $region17: #{net_forward.1} parent=1 // pred_fallthru
      _
    // Predicated region
    $region18: #{net_forward.1} parent=1 // pred_check
      _
    $region19: #{net_forward.1} parent=1 // pred_check_branch
      %36 = sbr.rel (0) target = $region21
    $region20: #{net_forward.1} parent=1 // pred_region
      _
    $region21: #{net_forward.1} parent=1 // pred_fallthru
      _
    // Predicated region
    $region22: #{net_forward.1} parent=1 // pred_check
      _
    $region23: #{net_forward.1} parent=1 // pred_check_branch
      %38 = sbr.rel (0) target = $region25
    $region24: #{net_forward.1} parent=1 // pred_region
      _
    $region25: #{net_forward.1} parent=1 // pred_fallthru
      _
    // Predicated region
    $region26: #{net_forward.1} parent=1 // pred_check
      _
    $region27: #{net_forward.1} parent=1 // pred_check_branch
      %40 = sbr.rel (0) target = $region29
    $region28: #{net_forward.1} parent=1 // pred_region
      _
    $region29: #{net_forward.1} parent=1 // pred_fallthru
      _
    // Predicated region
    $region30: #{net_forward.1} parent=1 // pred_check
      _
    $region31: #{net_forward.1} parent=1 // pred_check_branch
      %42 = sbr.rel (0) target = $region33
    $region32: #{net_forward.1} parent=1 // pred_region
      _
    $region33: #{net_forward.1} parent=1 // pred_fallthru
      _
    // Predicated region
    $region34: #{net_forward.1} parent=1 // pred_check
      _
    $region35: #{net_forward.1} parent=1 // pred_check_branch
      %44 = sbr.rel (0) target = $region37
    $region36: #{net_forward.1} parent=1 // pred_region
      _
    $region37: #{net_forward.1} parent=1 // pred_fallthru
      _
    // Predicated region
    $region38: #{net_forward.1} parent=1 // pred_check
      _
    $region39: #{net_forward.1} parent=1 // pred_check_branch
      %46 = sbr.rel (0) target = $region41
    $region40: #{net_forward.1} parent=1 // pred_region
      %47 = dma.done [#allocation5], 20480
    $region41: #{net_forward.1} parent=1 // pred_fallthru
      _
    %v48 = vld [vmem:[%s1] sm:$0xff]
    %v49 = vld [vmem:[%s1 + $0x8] sm:$0xff]
    %v50 = vld [vmem:[%s1 + $0x10] sm:$0xff]
    %v51 = vld [vmem:[%s1 + $0x18] sm:$0xff]
    %v52 = vld [vmem:[%s1 + $0x20] sm:$0xff]
    %v53 = vld [vmem:[%s1 + $0x28] sm:$0xff]
    %v54 = vld [vmem:[%s1 + $0x30] sm:$0xff]
    %v55 = vld [vmem:[%s1 + $0x38] sm:$0xff]
    %v56 = vld [vmem:[%s1 + $0x40] sm:$0xff]
    %v57 = vld [vmem:[%s1 + $0x48] sm:$0xff]
    %v58 = vld [vmem:[%s1 + $0x50] sm:$0xff]
    %v59 = vld [vmem:[%s1 + $0x58] sm:$0xff]
    %v60 = vld [vmem:[%s1 + $0x60] sm:$0xff]
    %v61 = vld [vmem:[%s1 + $0x68] sm:$0xff]
    %v62 = vld [vmem:[%s1 + $0x70] sm:$0xff]
    %v63 = vld [vmem:[%s1 + $0x78] sm:$0xff]
    %v64 = vld [vmem:[%s1 + $0x80] sm:$0xff]
    %v65 = vld [vmem:[%s1 + $0x88] sm:$0xff]
    %v66 = vld [vmem:[%s1 + $0x90] sm:$0xff]
    %v67 = vld [vmem:[%s1 + $0x98] sm:$0xff]
    %v68 = vld [vmem:[%s1 + $0xa0] sm:$0xff]
    %v69 = vld [vmem:[%s1 + $0xa8] sm:$0xff]
    %v70 = vld [vmem:[%s1 + $0xb0] sm:$0xff]
    %v71 = vld [vmem:[%s1 + $0xb8] sm:$0xff]
    %s72 = scalar_lea.vmem %s1, 8
    %v73 = vld [vmem:[%s72] sm:$0xff]
    %v74 = vld [vmem:[%s72 + $0x8] sm:$0xff]
    %v75 = vld [vmem:[%s72 + $0x10] sm:$0xff]
    %v76 = vld [vmem:[%s72 + $0x18] sm:$0xff]
    %v77 = vld [vmem:[%s72 + $0x20] sm:$0xff]
    %v78 = vld [vmem:[%s72 + $0x28] sm:$0xff]
    %v79 = vld [vmem:[%s72 + $0x30] sm:$0xff]
    %v80 = vld [vmem:[%s72 + $0x38] sm:$0xff]
    %v81 = vld [vmem:[%s72 + $0x40] sm:$0xff]
    %v82 = vld [vmem:[%s72 + $0x48] sm:$0xff]
    %v83 = vld [vmem:[%s72 + $0x50] sm:$0xff]
    %v84 = vld [vmem:[%s72 + $0x58] sm:$0xff]
    %v85 = vld [vmem:[%s72 + $0x60] sm:$0xff]
    %v86 = vld [vmem:[%s72 + $0x68] sm:$0xff]
    %v87 = vld [vmem:[%s72 + $0x70] sm:$0xff]
    %v88 = vld [vmem:[%s72 + $0x78] sm:$0xff]
    %v89 = vld [vmem:[%s72 + $0x80] sm:$0xff]
    %v90 = vld [vmem:[%s72 + $0x88] sm:$0xff]
    %v91 = vld [vmem:[%s72 + $0x90] sm:$0xff]
    %v92 = vld [vmem:[%s72 + $0x98] sm:$0xff]
    %v93 = vld [vmem:[%s72 + $0xa0] sm:$0xff]
    %v94 = vld [vmem:[%s72 + $0xa8] sm:$0xff]
    %v95 = vld [vmem:[%s72 + $0xb0] sm:$0xff]
    %v96 = vld [vmem:[%s72 + $0xb8] sm:$0xff]
    %s97 = scalar_lea.vmem %s1, 16
    %v98 = vld [vmem:[%s97] sm:$0xff]
    %v99 = vld [vmem:[%s97 + $0x8] sm:$0xff]
    %v100 = vld [vmem:[%s97 + $0x10] sm:$0xff]
    %v101 = vld [vmem:[%s97 + $0x18] sm:$0xff]
    %v102 = vld [vmem:[%s97 + $0x20] sm:$0xff]
    %v103 = vld [vmem:[%s97 + $0x28] sm:$0xff]
    %v104 = vld [vmem:[%s97 + $0x30] sm:$0xff]
    %v105 = vld [vmem:[%s97 + $0x38] sm:$0xff]
    %v106 = vld [vmem:[%s97 + $0x40] sm:$0xff]
    %v107 = vld [vmem:[%s97 + $0x48] sm:$0xff]
    %v108 = vld [vmem:[%s97 + $0x50] sm:$0xff]
    %v109 = vld [vmem:[%s97 + $0x58] sm:$0xff]
    %v110 = vld [vmem:[%s97 + $0x60] sm:$0xff]
    %v111 = vld [vmem:[%s97 + $0x68] sm:$0xff]
    %v112 = vld [vmem:[%s97 + $0x70] sm:$0xff]
    %v113 = vld [vmem:[%s97 + $0x78] sm:$0xff]
    %v114 = vld [vmem:[%s97 + $0x80] sm:$0xff]
    %v115 = vld [vmem:[%s97 + $0x88] sm:$0xff]
    %v116 = vld [vmem:[%s97 + $0x90] sm:$0xff]
    %v117 = vld [vmem:[%s97 + $0x98] sm:$0xff]
    %v118 = vld [vmem:[%s97 + $0xa0] sm:$0xff]
    %v119 = vld [vmem:[%s97 + $0xa8] sm:$0xff]
    %v120 = vld [vmem:[%s97 + $0xb0] sm:$0xff]
    %v121 = vld [vmem:[%s97 + $0xb8] sm:$0xff]
    %s122 = scalar_lea.vmem %s1, 24
    %v123 = vld [vmem:[%s122] sm:$0xff]
    %v124 = vld [vmem:[%s122 + $0x8] sm:$0xff]
    %v125 = vld [vmem:[%s122 + $0x10] sm:$0xff]
    %v126 = vld [vmem:[%s122 + $0x18] sm:$0xff]
    %v127 = vld [vmem:[%s122 + $0x20] sm:$0xff]
    %v128 = vld [vmem:[%s122 + $0x28] sm:$0xff]
    %v129 = vld [vmem:[%s122 + $0x30] sm:$0xff]
    %v130 = vld [vmem:[%s122 + $0x38] sm:$0xff]
    %v131 = vld [vmem:[%s122 + $0x40] sm:$0xff]
    %v132 = vld [vmem:[%s122 + $0x48] sm:$0xff]
    %v133 = vld [vmem:[%s122 + $0x50] sm:$0xff]
    %v134 = vld [vmem:[%s122 + $0x58] sm:$0xff]
    %v135 = vld [vmem:[%s122 + $0x60] sm:$0xff]
    %v136 = vld [vmem:[%s122 + $0x68] sm:$0xff]
    %v137 = vld [vmem:[%s122 + $0x70] sm:$0xff]
    %v138 = vld [vmem:[%s122 + $0x78] sm:$0xff]
    %v139 = vld [vmem:[%s122 + $0x80] sm:$0xff]
    %v140 = vld [vmem:[%s122 + $0x88] sm:$0xff]
    %v141 = vld [vmem:[%s122 + $0x90] sm:$0xff]
    %v142 = vld [vmem:[%s122 + $0x98] sm:$0xff]
    %v143 = vld [vmem:[%s122 + $0xa0] sm:$0xff]
    %v144 = vld [vmem:[%s122 + $0xa8] sm:$0xff]
    %v145 = vld [vmem:[%s122 + $0xb0] sm:$0xff]
    %v146 = vld [vmem:[%s122 + $0xb8] sm:$0xff]
    %s147 = scalar_lea.vmem %s1, 32
    %v148 = vld [vmem:[%s147] sm:$0xff]
    %v149 = vld [vmem:[%s147 + $0x8] sm:$0xff]
    %v150 = vld [vmem:[%s147 + $0x10] sm:$0xff]
    %v151 = vld [vmem:[%s147 + $0x18] sm:$0xff]
    %v152 = vld [vmem:[%s147 + $0x20] sm:$0xff]
    %v153 = vld [vmem:[%s147 + $0x28] sm:$0xff]
    %v154 = vld [vmem:[%s147 + $0x30] sm:$0xff]
    %v155 = vld [vmem:[%s147 + $0x38] sm:$0xff]
    %v156 = vld [vmem:[%s147 + $0x40] sm:$0xff]
    %v157 = vld [vmem:[%s147 + $0x48] sm:$0xff]
    %v158 = vld [vmem:[%s147 + $0x50] sm:$0xff]
    %v159 = vld [vmem:[%s147 + $0x58] sm:$0xff]
    %v160 = vld [vmem:[%s147 + $0x60] sm:$0xff]
    %v161 = vld [vmem:[%s147 + $0x68] sm:$0xff]
    %v162 = vld [vmem:[%s147 + $0x70] sm:$0xff]
    %v163 = vld [vmem:[%s147 + $0x78] sm:$0xff]
    %v164 = vld [vmem:[%s147 + $0x80] sm:$0xff]
    %v165 = vld [vmem:[%s147 + $0x88] sm:$0xff]
    %v166 = vld [vmem:[%s147 + $0x90] sm:$0xff]
    %v167 = vld [vmem:[%s147 + $0x98] sm:$0xff]
    %v168 = vld [vmem:[%s147 + $0xa0] sm:$0xff]
    %v169 = vld [vmem:[%s147 + $0xa8] sm:$0xff]
    %v170 = vld [vmem:[%s147 + $0xb0] sm:$0xff]
    %v171 = vld [vmem:[%s147 + $0xb8] sm:$0xff]
    %196 = vrot.lane.b32.xlu0 %v73, 28
    %v197 = vpop.permute.xlu0 %196
    %198 = vrot.lane.b32.xlu0 %v74, 28
    %v199 = vpop.permute.xlu0 %198
    %200 = vrot.lane.b32.xlu0 %v75, 28
    %v201 = vpop.permute.xlu0 %200
    %202 = vrot.lane.b32.xlu0 %v76, 28
    %v203 = vpop.permute.xlu0 %202
    %204 = vrot.lane.b32.xlu0 %v77, 28
    %v205 = vpop.permute.xlu0 %204
    %206 = vrot.lane.b32.xlu0 %v78, 28
    %v207 = vpop.permute.xlu0 %206
    %208 = vrot.lane.b32.xlu0 %v79, 28
    %v209 = vpop.permute.xlu0 %208
    %210 = vrot.lane.b32.xlu0 %v80, 28
    %v211 = vpop.permute.xlu0 %210
    %212 = vrot.lane.b32.xlu0 %v81, 28
    %v213 = vpop.permute.xlu0 %212
    %214 = vrot.lane.b32.xlu0 %v82, 28
    %v215 = vpop.permute.xlu0 %214
    %216 = vrot.lane.b32.xlu0 %v83, 28
    %v217 = vpop.permute.xlu0 %216
    %218 = vrot.lane.b32.xlu0 %v84, 28
    %v219 = vpop.permute.xlu0 %218
    %220 = vrot.lane.b32.xlu0 %v85, 28
    %v221 = vpop.permute.xlu0 %220
    %222 = vrot.lane.b32.xlu0 %v86, 28
    %v223 = vpop.permute.xlu0 %222
    %224 = vrot.lane.b32.xlu0 %v87, 28
    %v225 = vpop.permute.xlu0 %224
    %226 = vrot.lane.b32.xlu0 %v88, 28
    %v227 = vpop.permute.xlu0 %226
    %228 = vrot.lane.b32.xlu0 %v89, 28
    %v229 = vpop.permute.xlu0 %228
    %230 = vrot.lane.b32.xlu0 %v90, 28
    %v231 = vpop.permute.xlu0 %230
    %232 = vrot.lane.b32.xlu0 %v91, 28
    %v233 = vpop.permute.xlu0 %232
    %234 = vrot.lane.b32.xlu0 %v92, 28
    %v235 = vpop.permute.xlu0 %234
    %236 = vrot.lane.b32.xlu0 %v93, 28
    %v237 = vpop.permute.xlu0 %236
    %238 = vrot.lane.b32.xlu0 %v94, 28
    %v239 = vpop.permute.xlu0 %238
    %240 = vrot.lane.b32.xlu0 %v95, 28
    %v241 = vpop.permute.xlu0 %240
    %242 = vrot.lane.b32.xlu0 %v96, 28
    %v243 = vpop.permute.xlu0 %242
    %292 = vrot.lane.b32.xlu0 %v98, 56
    %v293 = vpop.permute.xlu0 %292
    %294 = vrot.lane.b32.xlu0 %v99, 56
    %v295 = vpop.permute.xlu0 %294
    %296 = vrot.lane.b32.xlu0 %v100, 56
    %v297 = vpop.permute.xlu0 %296
    %298 = vrot.lane.b32.xlu0 %v101, 56
    %v299 = vpop.permute.xlu0 %298
    %300 = vrot.lane.b32.xlu0 %v102, 56
    %v301 = vpop.permute.xlu0 %300
    %302 = vrot.lane.b32.xlu0 %v103, 56
    %v303 = vpop.permute.xlu0 %302
    %304 = vrot.lane.b32.xlu0 %v104, 56
    %v305 = vpop.permute.xlu0 %304
    %306 = vrot.lane.b32.xlu0 %v105, 56
    %v307 = vpop.permute.xlu0 %306
    %308 = vrot.lane.b32.xlu0 %v106, 56
    %v309 = vpop.permute.xlu0 %308
    %310 = vrot.lane.b32.xlu0 %v107, 56
    %v311 = vpop.permute.xlu0 %310
    %312 = vrot.lane.b32.xlu0 %v108, 56
    %v313 = vpop.permute.xlu0 %312
    %314 = vrot.lane.b32.xlu0 %v109, 56
    %v315 = vpop.permute.xlu0 %314
    %316 = vrot.lane.b32.xlu0 %v110, 56
    %v317 = vpop.permute.xlu0 %316
    %318 = vrot.lane.b32.xlu0 %v111, 56
    %v319 = vpop.permute.xlu0 %318
    %320 = vrot.lane.b32.xlu0 %v112, 56
    %v321 = vpop.permute.xlu0 %320
    %322 = vrot.lane.b32.xlu0 %v113, 56
    %v323 = vpop.permute.xlu0 %322
    %324 = vrot.lane.b32.xlu0 %v114, 56
    %v325 = vpop.permute.xlu0 %324
    %326 = vrot.lane.b32.xlu0 %v115, 56
    %v327 = vpop.permute.xlu0 %326
    %328 = vrot.lane.b32.xlu0 %v116, 56
    %v329 = vpop.permute.xlu0 %328
    %330 = vrot.lane.b32.xlu0 %v117, 56
    %v331 = vpop.permute.xlu0 %330
    %332 = vrot.lane.b32.xlu0 %v118, 56
    %v333 = vpop.permute.xlu0 %332
    %334 = vrot.lane.b32.xlu0 %v119, 56
    %v335 = vpop.permute.xlu0 %334
    %336 = vrot.lane.b32.xlu0 %v120, 56
    %v337 = vpop.permute.xlu0 %336
    %338 = vrot.lane.b32.xlu0 %v121, 56
    %v339 = vpop.permute.xlu0 %338
    %388 = vrot.lane.b32.xlu0 %v123, 84
    %v389 = vpop.permute.xlu0 %388
    %390 = vrot.lane.b32.xlu0 %v124, 84
    %v391 = vpop.permute.xlu0 %390
    %392 = vrot.lane.b32.xlu0 %v125, 84
    %v393 = vpop.permute.xlu0 %392
    %394 = vrot.lane.b32.xlu0 %v126, 84
    %v395 = vpop.permute.xlu0 %394
    %396 = vrot.lane.b32.xlu0 %v127, 84
    %v397 = vpop.permute.xlu0 %396
    %398 = vrot.lane.b32.xlu0 %v128, 84
    %v399 = vpop.permute.xlu0 %398
    %400 = vrot.lane.b32.xlu0 %v129, 84
    %v401 = vpop.permute.xlu0 %400
    %402 = vrot.lane.b32.xlu0 %v130, 84
    %v403 = vpop.permute.xlu0 %402
    %404 = vrot.lane.b32.xlu0 %v131, 84
    %v405 = vpop.permute.xlu0 %404
    %406 = vrot.lane.b32.xlu0 %v132, 84
    %v407 = vpop.permute.xlu0 %406
    %408 = vrot.lane.b32.xlu0 %v133, 84
    %v409 = vpop.permute.xlu0 %408
    %410 = vrot.lane.b32.xlu0 %v134, 84
    %v411 = vpop.permute.xlu0 %410
    %412 = vrot.lane.b32.xlu0 %v135, 84
    %v413 = vpop.permute.xlu0 %412
    %414 = vrot.lane.b32.xlu0 %v136, 84
    %v415 = vpop.permute.xlu0 %414
    %416 = vrot.lane.b32.xlu0 %v137, 84
    %v417 = vpop.permute.xlu0 %416
    %418 = vrot.lane.b32.xlu0 %v138, 84
    %v419 = vpop.permute.xlu0 %418
    %420 = vrot.lane.b32.xlu0 %v139, 84
    %v421 = vpop.permute.xlu0 %420
    %422 = vrot.lane.b32.xlu0 %v140, 84
    %v423 = vpop.permute.xlu0 %422
    %424 = vrot.lane.b32.xlu0 %v141, 84
    %v425 = vpop.permute.xlu0 %424
    %426 = vrot.lane.b32.xlu0 %v142, 84
    %v427 = vpop.permute.xlu0 %426
    %428 = vrot.lane.b32.xlu0 %v143, 84
    %v429 = vpop.permute.xlu0 %428
    %430 = vrot.lane.b32.xlu0 %v144, 84
    %v431 = vpop.permute.xlu0 %430
    %432 = vrot.lane.b32.xlu0 %v145, 84
    %v433 = vpop.permute.xlu0 %432
    %434 = vrot.lane.b32.xlu0 %v146, 84
    %v435 = vpop.permute.xlu0 %434
    %484 = vrot.lane.b32.xlu0 %v148, 112
    %v485 = vpop.permute.xlu0 %484
    %486 = vrot.lane.b32.xlu0 %v149, 112
    %v487 = vpop.permute.xlu0 %486
    %488 = vrot.lane.b32.xlu0 %v150, 112
    %v489 = vpop.permute.xlu0 %488
    %490 = vrot.lane.b32.xlu0 %v151, 112
    %v491 = vpop.permute.xlu0 %490
    %492 = vrot.lane.b32.xlu0 %v152, 112
    %v493 = vpop.permute.xlu0 %492
    %494 = vrot.lane.b32.xlu0 %v153, 112
    %v495 = vpop.permute.xlu0 %494
    %496 = vrot.lane.b32.xlu0 %v154, 112
    %v497 = vpop.permute.xlu0 %496
    %498 = vrot.lane.b32.xlu0 %v155, 112
    %v499 = vpop.permute.xlu0 %498
    %500 = vrot.lane.b32.xlu0 %v156, 112
    %v501 = vpop.permute.xlu0 %500
    %502 = vrot.lane.b32.xlu0 %v157, 112
    %v503 = vpop.permute.xlu0 %502
    %504 = vrot.lane.b32.xlu0 %v158, 112
    %v505 = vpop.permute.xlu0 %504
    %506 = vrot.lane.b32.xlu0 %v159, 112
    %v507 = vpop.permute.xlu0 %506
    %508 = vrot.lane.b32.xlu0 %v160, 112
    %v509 = vpop.permute.xlu0 %508
    %510 = vrot.lane.b32.xlu0 %v161, 112
    %v511 = vpop.permute.xlu0 %510
    %512 = vrot.lane.b32.xlu0 %v162, 112
    %v513 = vpop.permute.xlu0 %512
    %514 = vrot.lane.b32.xlu0 %v163, 112
    %v515 = vpop.permute.xlu0 %514
    %516 = vrot.lane.b32.xlu0 %v164, 112
    %v517 = vpop.permute.xlu0 %516
    %518 = vrot.lane.b32.xlu0 %v165, 112
    %v519 = vpop.permute.xlu0 %518
    %520 = vrot.lane.b32.xlu0 %v166, 112
    %v521 = vpop.permute.xlu0 %520
    %522 = vrot.lane.b32.xlu0 %v167, 112
    %v523 = vpop.permute.xlu0 %522
    %524 = vrot.lane.b32.xlu0 %v168, 112
    %v525 = vpop.permute.xlu0 %524
    %526 = vrot.lane.b32.xlu0 %v169, 112
    %v527 = vpop.permute.xlu0 %526
    %528 = vrot.lane.b32.xlu0 %v170, 112
    %v529 = vpop.permute.xlu0 %528
    %530 = vrot.lane.b32.xlu0 %v171, 112
    %v531 = vpop.permute.xlu0 %530
    %vm556 = vcmask 228352
    %v557 = vsel %vm556, %v48, %v197
    %v558 = vsel %vm556, %v49, %v199
    %v559 = vsel %vm556, %v50, %v201
    %v560 = vsel %vm556, %v51, %v203
    %v561 = vsel %vm556, %v52, %v205
    %v562 = vsel %vm556, %v53, %v207
    %v563 = vsel %vm556, %v54, %v209
    %v564 = vsel %vm556, %v55, %v211
    %v565 = vsel %vm556, %v56, %v213
    %v566 = vsel %vm556, %v57, %v215
    %v567 = vsel %vm556, %v58, %v217
    %v568 = vsel %vm556, %v59, %v219
    %v569 = vsel %vm556, %v60, %v221
    %v570 = vsel %vm556, %v61, %v223
    %v571 = vsel %vm556, %v62, %v225
    %v572 = vsel %vm556, %v63, %v227
    %v573 = vsel %vm556, %v64, %v229
    %v574 = vsel %vm556, %v65, %v231
    %v575 = vsel %vm556, %v66, %v233
    %v576 = vsel %vm556, %v67, %v235
    %v577 = vsel %vm556, %v68, %v237
    %v578 = vsel %vm556, %v69, %v239
    %v579 = vsel %vm556, %v70, %v241
    %v580 = vsel %vm556, %v71, %v243
    %vm581 = vcmask 457728
    %v582 = vsel %vm581, %v557, %v293
    %v583 = vsel %vm581, %v558, %v295
    %v584 = vsel %vm581, %v559, %v297
    %v585 = vsel %vm581, %v560, %v299
    %v586 = vsel %vm581, %v561, %v301
    %v587 = vsel %vm581, %v562, %v303
    %v588 = vsel %vm581, %v563, %v305
    %v589 = vsel %vm581, %v564, %v307
    %v590 = vsel %vm581, %v565, %v309
    %v591 = vsel %vm581, %v566, %v311
    %v592 = vsel %vm581, %v567, %v313
    %v593 = vsel %vm581, %v568, %v315
    %v594 = vsel %vm581, %v569, %v317
    %v595 = vsel %vm581, %v570, %v319
    %v596 = vsel %vm581, %v571, %v321
    %v597 = vsel %vm581, %v572, %v323
    %v598 = vsel %vm581, %v573, %v325
    %v599 = vsel %vm581, %v574, %v327
    %v600 = vsel %vm581, %v575, %v329
    %v601 = vsel %vm581, %v576, %v331
    %v602 = vsel %vm581, %v577, %v333
    %v603 = vsel %vm581, %v578, %v335
    %v604 = vsel %vm581, %v579, %v337
    %v605 = vsel %vm581, %v580, %v339
    %vm606 = vcmask 687104
    %v607 = vsel %vm606, %v582, %v389
    %v608 = vsel %vm606, %v583, %v391
    %v609 = vsel %vm606, %v584, %v393
    %v610 = vsel %vm606, %v585, %v395
    %v611 = vsel %vm606, %v586, %v397
    %v612 = vsel %vm606, %v587, %v399
    %v613 = vsel %vm606, %v588, %v401
    %v614 = vsel %vm606, %v589, %v403
    %v615 = vsel %vm606, %v590, %v405
    %v616 = vsel %vm606, %v591, %v407
    %v617 = vsel %vm606, %v592, %v409
    %v618 = vsel %vm606, %v593, %v411
    %v619 = vsel %vm606, %v594, %v413
    %v620 = vsel %vm606, %v595, %v415
    %v621 = vsel %vm606, %v596, %v417
    %v622 = vsel %vm606, %v597, %v419
    %v623 = vsel %vm606, %v598, %v421
    %v624 = vsel %vm606, %v599, %v423
    %v625 = vsel %vm606, %v600, %v425
    %v626 = vsel %vm606, %v601, %v427
    %v627 = vsel %vm606, %v602, %v429
    %v628 = vsel %vm606, %v603, %v431
    %v629 = vsel %vm606, %v604, %v433
    %v630 = vsel %vm606, %v605, %v435
    %vm631 = vcmask 916480
    %v632 = vsel %vm631, %v607, %v485
    %v633 = vsel %vm631, %v608, %v487
    %v634 = vsel %vm631, %v609, %v489
    %v635 = vsel %vm631, %v610, %v491
    %v636 = vsel %vm631, %v611, %v493
    %v637 = vsel %vm631, %v612, %v495
    %v638 = vsel %vm631, %v613, %v497
    %v639 = vsel %vm631, %v614, %v499
    %v640 = vsel %vm631, %v615, %v501
    %v641 = vsel %vm631, %v616, %v503
    %v642 = vsel %vm631, %v617, %v505
    %v643 = vsel %vm631, %v618, %v507
    %v644 = vsel %vm631, %v619, %v509
    %v645 = vsel %vm631, %v620, %v511
    %v646 = vsel %vm631, %v621, %v513
    %v647 = vsel %vm631, %v622, %v515
    %v648 = vsel %vm631, %v623, %v517
    %v649 = vsel %vm631, %v624, %v519
    %v650 = vsel %vm631, %v625, %v521
    %v651 = vsel %vm631, %v626, %v523
    %v652 = vsel %vm631, %v627, %v525
    %v653 = vsel %vm631, %v628, %v527
    %v654 = vsel %vm631, %v629, %v529
    %v655 = vsel %vm631, %v630, %v531
    %v656 = vld [vmem:[%s2] sm:$0xff]
    %v657 = vld [vmem:[%s2 + $0x8] sm:$0xff]
    %v658 = vld [vmem:[%s2 + $0x10] sm:$0xff]
    %v659 = vld [vmem:[%s2 + $0x18] sm:$0xff]
    %v660 = vld [vmem:[%s2 + $0x20] sm:$0xff]
    %v661 = vld [vmem:[%s2 + $0x28] sm:$0xff]
    %v662 = vld [vmem:[%s2 + $0x30] sm:$0xff]
    %v663 = vld [vmem:[%s2 + $0x38] sm:$0xff]
    %v664 = vld [vmem:[%s2 + $0x40] sm:$0xff]
    %v665 = vld [vmem:[%s2 + $0x48] sm:$0xff]
    %v666 = vld [vmem:[%s2 + $0x50] sm:$0xff]
    %v667 = vld [vmem:[%s2 + $0x58] sm:$0xff]
    %v668 = vld [vmem:[%s2 + $0x60] sm:$0xff]
    %v669 = vld [vmem:[%s2 + $0x68] sm:$0xff]
    %v670 = vld [vmem:[%s2 + $0x70] sm:$0xff]
    %v671 = vld [vmem:[%s2 + $0x78] sm:$0xff]
    %v672 = vld [vmem:[%s2 + $0x80] sm:$0xff]
    %v673 = vld [vmem:[%s2 + $0x88] sm:$0xff]
    %v674 = vld [vmem:[%s2 + $0x90] sm:$0xff]
    %v675 = vld [vmem:[%s2 + $0x98] sm:$0xff]
    %v676 = vld [vmem:[%s2 + $0xa0] sm:$0xff]
    %v677 = vld [vmem:[%s2 + $0xa8] sm:$0xff]
    %v678 = vld [vmem:[%s2 + $0xb0] sm:$0xff]
    %v679 = vld [vmem:[%s2 + $0xb8] sm:$0xff]
    %v680 = vld [vmem:[%s2 + $0xc0] sm:$0xff]
    %v681 = vld [vmem:[%s2 + $0xc8] sm:$0xff]
    %v682 = vld [vmem:[%s2 + $0xd0] sm:$0xff]
    %v683 = vld [vmem:[%s2 + $0xd8] sm:$0xff]
    %v684 = vld [vmem:[%s2 + $0xe0] sm:$0xff]
    %v685 = vld [vmem:[%s2 + $0xe8] sm:$0xff]
    %v686 = vld [vmem:[%s2 + $0xf0] sm:$0xff]
    %v687 = vld [vmem:[%s2 + $0xf8] sm:$0xff]
    %v688 = vld [vmem:[%s2 + $0x100] sm:$0xff]
    %v689 = vld [vmem:[%s2 + $0x108] sm:$0xff]
    %v690 = vld [vmem:[%s2 + $0x110] sm:$0xf]
    %v691 = vld [vmem:[%s2 + $0x118] sm:$0xf]
    %v692 = vld [vmem:[%s3] sm:$0x3]
    %v694 = vlaneseq
    %v695 = vshrl.u32 %v694, 7
    %v696 = vsub.s32 0, %v695
    %v697 = vrot.slane %v692, %v696
    %v698 = vlaneseq
    %v699 = vshrl.u32 %v698, 7
    %v700 = vsub.s32 1, %v699
    %v701 = vrot.slane %v692, %v700
    %vm704 = vcmask 97280
    %v705 = vsel %vm704, %v485, 0
    %v707 = vsel %vm704, %v487, 0
    %v709 = vsel %vm704, %v489, 0
    %v711 = vsel %vm704, %v491, 0
    %v713 = vsel %vm704, %v493, 0
    %v715 = vsel %vm704, %v495, 0
    %v717 = vsel %vm704, %v497, 0
    %v719 = vsel %vm704, %v499, 0
    %v721 = vsel %vm704, %v501, 0
    %v723 = vsel %vm704, %v503, 0
    %v725 = vsel %vm704, %v505, 0
    %v727 = vsel %vm704, %v507, 0
    %v729 = vsel %vm704, %v509, 0
    %v731 = vsel %vm704, %v511, 0
    %v733 = vsel %vm704, %v513, 0
    %v735 = vsel %vm704, %v515, 0
    %v737 = vsel %vm704, %v517, 0
    %v739 = vsel %vm704, %v519, 0
    %v741 = vsel %vm704, %v521, 0
    %v743 = vsel %vm704, %v523, 0
    %v745 = vsel %vm704, %v525, 0
    %v747 = vsel %vm704, %v527, 0
    %v749 = vsel %vm704, %v529, 0
    %v751 = vsel %vm704, %v531, 0
    %vm753 = vcmask 1043456
    %v755 = vsel %vm753, %v690, 0
    %v758 = vsel %vm753, %v691, 0
    %760 = vmatprep.subr.mxu0 %v687
    %761 = vmatpush1.msra.mxu0 %v686
    %762 = vmatprep.subr.mxu0 %v685
    %763 = vmatpush1.msra.mxu0 %v684
    %764 = vmatprep.subr.mxu0 %v683
    %765 = vmatpush1.msra.mxu0 %v682
    %766 = vmatprep.subr.mxu0 %v681
    %767 = vmatpush1.msra.mxu0 %v680
    %768 = vmatprep.subr.mxu0 %v679
    %769 = vmatpush1.msra.mxu0 %v678
    %770 = vmatprep.subr.mxu0 %v677
    %771 = vmatpush1.msra.mxu0 %v676
    %772 = vmatprep.subr.mxu0 %v675
    %773 = vmatpush1.msra.mxu0 %v674
    %774 = vmatprep.subr.mxu0 %v673
    %775 = vmatpush1.msra.mxu0 %v672
    %776 = vmatprep.subr.mxu0 %v671
    %777 = vmatpush1.msra.mxu0 %v670
    %778 = vmatprep.subr.mxu0 %v669
    %779 = vmatpush1.msra.mxu0 %v668
    %780 = vmatprep.subr.mxu0 %v667
    %781 = vmatpush1.msra.mxu0 %v666
    %782 = vmatprep.subr.mxu0 %v665
    %783 = vmatpush1.msra.mxu0 %v664
    %784 = vmatprep.subr.mxu0 %v663
    %785 = vmatpush1.msra.mxu0 %v662
    %786 = vmatprep.subr.mxu0 %v661
    %787 = vmatpush1.msra.mxu0 %v660
    %788 = vmatprep.subr.mxu0 %v659
    %789 = vmatpush1.msra.mxu0 %v658
    %790 = vmatprep.subr.mxu0 %v657
    %791 = vmatpush1.msra.mxu0 %v656
    %792 = vmatprep.subr.mxu0 0.0
    %793 = vmatpush2.msra.mxu0 0.0
    %794 = vmatprep.subr.mxu0 0.0
    %795 = vmatpush2.msra.mxu0 0.0
    %796 = vmatprep.subr.mxu0 0.0
    %797 = vmatpush2.msra.mxu0 0.0
    %798 = vmatprep.subr.mxu0 0.0
    %799 = vmatpush2.msra.mxu0 0.0
    %800 = vmatprep.subr.mxu0 0.0
    %801 = vmatpush2.msra.mxu0 0.0
    %802 = vmatprep.subr.mxu0 0.0
    %803 = vmatpush2.msra.mxu0 0.0
    %804 = vmatprep.subr.mxu0 0.0
    %805 = vmatpush2.msra.mxu0 0.0
    %806 = vmatprep.subr.mxu0 0.0
    %807 = vmatpush2.msra.mxu0 0.0
    %808 = vmatprep.subr.mxu0 0.0
    %809 = vmatpush2.msra.mxu0 0.0
    %810 = vmatprep.subr.mxu0 0.0
    %811 = vmatpush2.msra.mxu0 0.0
    %812 = vmatprep.subr.mxu0 0.0
    %813 = vmatpush2.msra.mxu0 0.0
    %814 = vmatprep.subr.mxu0 0.0
    %815 = vmatpush2.msra.mxu0 0.0
    %816 = vmatprep.subr.mxu0 0.0
    %817 = vmatpush2.msra.mxu0 0.0
    %818 = vmatprep.subr.mxu0 0.0
    %819 = vmatpush2.msra.mxu0 0.0
    %820 = vmatprep.subr.mxu0 %v758
    %821 = vmatpush2.msra.mxu0 %v755
    %822 = vmatprep.subr.mxu0 %v689
    %823 = vmatpush2.msra.mxu0 %v688
    %824 = vmatprep.mubr.f32.mxu0 %v705
    %825 = vmatmul.mubr.f32.gmra.mxu0 %v632
    %v826 = vpop.f32.mrf.mxu0
    %v827 = vadd.f32 %v697, %v826
    %v828 = vpop.f32.mrf.mxu0
    %v829 = vadd.f32 %v701, %v828
    %830 = vmatprep.mubr.f32.mxu0 %v707
    %831 = vmatmul.mubr.f32.gmra.mxu0 %v633
    %v832 = vpop.f32.mrf.mxu0
    %v833 = vadd.f32 %v697, %v832
    %v834 = vpop.f32.mrf.mxu0
    %v835 = vadd.f32 %v701, %v834
    %836 = vmatprep.mubr.f32.mxu0 %v709
    %837 = vmatmul.mubr.f32.gmra.mxu0 %v634
    %v838 = vpop.f32.mrf.mxu0
    %v839 = vadd.f32 %v697, %v838
    %v840 = vpop.f32.mrf.mxu0
    %v841 = vadd.f32 %v701, %v840
    %842 = vmatprep.mubr.f32.mxu0 %v711
    %843 = vmatmul.mubr.f32.gmra.mxu0 %v635
    %v844 = vpop.f32.mrf.mxu0
    %v845 = vadd.f32 %v697, %v844
    %v846 = vpop.f32.mrf.mxu0
    %v847 = vadd.f32 %v701, %v846
    %848 = vmatprep.mubr.f32.mxu0 %v713
    %849 = vmatmul.mubr.f32.gmra.mxu0 %v636
    %v850 = vpop.f32.mrf.mxu0
    %v851 = vadd.f32 %v697, %v850
    %v852 = vpop.f32.mrf.mxu0
    %v853 = vadd.f32 %v701, %v852
    %854 = vmatprep.mubr.f32.mxu0 %v715
    %855 = vmatmul.mubr.f32.gmra.mxu0 %v637
    %v856 = vpop.f32.mrf.mxu0
    %v857 = vadd.f32 %v697, %v856
    %v858 = vpop.f32.mrf.mxu0
    %v859 = vadd.f32 %v701, %v858
    %860 = vmatprep.mubr.f32.mxu0 %v717
    %861 = vmatmul.mubr.f32.gmra.mxu0 %v638
    %v862 = vpop.f32.mrf.mxu0
    %v863 = vadd.f32 %v697, %v862
    %v864 = vpop.f32.mrf.mxu0
    %v865 = vadd.f32 %v701, %v864
    %866 = vmatprep.mubr.f32.mxu0 %v719
    %867 = vmatmul.mubr.f32.gmra.mxu0 %v639
    %v868 = vpop.f32.mrf.mxu0
    %v869 = vadd.f32 %v697, %v868
    %v870 = vpop.f32.mrf.mxu0
    %v871 = vadd.f32 %v701, %v870
    %872 = vmatprep.mubr.f32.mxu0 %v721
    %873 = vmatmul.mubr.f32.gmra.mxu0 %v640
    %v874 = vpop.f32.mrf.mxu0
    %v875 = vadd.f32 %v697, %v874
    %v876 = vpop.f32.mrf.mxu0
    %v877 = vadd.f32 %v701, %v876
    %878 = vmatprep.mubr.f32.mxu0 %v723
    %879 = vmatmul.mubr.f32.gmra.mxu0 %v641
    %v880 = vpop.f32.mrf.mxu0
    %v881 = vadd.f32 %v697, %v880
    %v882 = vpop.f32.mrf.mxu0
    %v883 = vadd.f32 %v701, %v882
    %884 = vmatprep.mubr.f32.mxu0 %v725
    %885 = vmatmul.mubr.f32.gmra.mxu0 %v642
    %v886 = vpop.f32.mrf.mxu0
    %v887 = vadd.f32 %v697, %v886
    %v888 = vpop.f32.mrf.mxu0
    %v889 = vadd.f32 %v701, %v888
    %890 = vmatprep.mubr.f32.mxu0 %v727
    %891 = vmatmul.mubr.f32.gmra.mxu0 %v643
    %v892 = vpop.f32.mrf.mxu0
    %v893 = vadd.f32 %v697, %v892
    %v894 = vpop.f32.mrf.mxu0
    %v895 = vadd.f32 %v701, %v894
    %896 = vmatprep.mubr.f32.mxu0 %v729
    %897 = vmatmul.mubr.f32.gmra.mxu0 %v644
    %v898 = vpop.f32.mrf.mxu0
    %v899 = vadd.f32 %v697, %v898
    %v900 = vpop.f32.mrf.mxu0
    %v901 = vadd.f32 %v701, %v900
    %902 = vmatprep.mubr.f32.mxu0 %v731
    %903 = vmatmul.mubr.f32.gmra.mxu0 %v645
    %v904 = vpop.f32.mrf.mxu0
    %v905 = vadd.f32 %v697, %v904
    %v906 = vpop.f32.mrf.mxu0
    %v907 = vadd.f32 %v701, %v906
    %908 = vmatprep.mubr.f32.mxu0 %v733
    %909 = vmatmul.mubr.f32.gmra.mxu0 %v646
    %v910 = vpop.f32.mrf.mxu0
    %v911 = vadd.f32 %v697, %v910
    %v912 = vpop.f32.mrf.mxu0
    %v913 = vadd.f32 %v701, %v912
    %914 = vmatprep.mubr.f32.mxu0 %v735
    %915 = vmatmul.mubr.f32.gmra.mxu0 %v647
    %v916 = vpop.f32.mrf.mxu0
    %v917 = vadd.f32 %v697, %v916
    %v918 = vpop.f32.mrf.mxu0
    %v919 = vadd.f32 %v701, %v918
    %920 = vmatprep.mubr.f32.mxu0 %v737
    %921 = vmatmul.mubr.f32.gmra.mxu0 %v648
    %v922 = vpop.f32.mrf.mxu0
    %v923 = vadd.f32 %v697, %v922
    %v924 = vpop.f32.mrf.mxu0
    %v925 = vadd.f32 %v701, %v924
    %926 = vmatprep.mubr.f32.mxu0 %v739
    %927 = vmatmul.mubr.f32.gmra.mxu0 %v649
    %v928 = vpop.f32.mrf.mxu0
    %v929 = vadd.f32 %v697, %v928
    %v930 = vpop.f32.mrf.mxu0
    %v931 = vadd.f32 %v701, %v930
    %932 = vmatprep.mubr.f32.mxu0 %v741
    %933 = vmatmul.mubr.f32.gmra.mxu0 %v650
    %v934 = vpop.f32.mrf.mxu0
    %v935 = vadd.f32 %v697, %v934
    %v936 = vpop.f32.mrf.mxu0
    %v937 = vadd.f32 %v701, %v936
    %938 = vmatprep.mubr.f32.mxu0 %v743
    %939 = vmatmul.mubr.f32.gmra.mxu0 %v651
    %v940 = vpop.f32.mrf.mxu0
    %v941 = vadd.f32 %v697, %v940
    %v942 = vpop.f32.mrf.mxu0
    %v943 = vadd.f32 %v701, %v942
    %944 = vmatprep.mubr.f32.mxu0 %v745
    %945 = vmatmul.mubr.f32.gmra.mxu0 %v652
    %v946 = vpop.f32.mrf.mxu0
    %v947 = vadd.f32 %v697, %v946
    %v948 = vpop.f32.mrf.mxu0
    %v949 = vadd.f32 %v701, %v948
    %950 = vmatprep.mubr.f32.mxu0 %v747
    %951 = vmatmul.mubr.f32.gmra.mxu0 %v653
    %v952 = vpop.f32.mrf.mxu0
    %v953 = vadd.f32 %v697, %v952
    %v954 = vpop.f32.mrf.mxu0
    %v955 = vadd.f32 %v701, %v954
    %956 = vmatprep.mubr.f32.mxu0 %v749
    %957 = vmatmul.mubr.f32.gmra.mxu0 %v654
    %v958 = vpop.f32.mrf.mxu0
    %v959 = vadd.f32 %v697, %v958
    %v960 = vpop.f32.mrf.mxu0
    %v961 = vadd.f32 %v701, %v960
    %962 = vmatprep.mubr.f32.mxu0 %v751
    %963 = vmatmul.mubr.f32.gmra.mxu0 %v655
    %v964 = vpop.f32.mrf.mxu0
    %v965 = vadd.f32 %v697, %v964
    %v966 = vpop.f32.mrf.mxu0
    %v967 = vadd.f32 %v701, %v966
    %968 = vdwg.mxu0
    %v969 = vmax.f32 %v827, %v829
    %v970 = vmax.f32 %v833, %v835
    %v971 = vmax.f32 %v839, %v841
    %v972 = vmax.f32 %v845, %v847
    %v973 = vmax.f32 %v851, %v853
    %v974 = vmax.f32 %v857, %v859
    %v975 = vmax.f32 %v863, %v865
    %v976 = vmax.f32 %v869, %v871
    %v977 = vmax.f32 %v875, %v877
    %v978 = vmax.f32 %v881, %v883
    %v979 = vmax.f32 %v887, %v889
    %v980 = vmax.f32 %v893, %v895
    %v981 = vmax.f32 %v899, %v901
    %v982 = vmax.f32 %v905, %v907
    %v983 = vmax.f32 %v911, %v913
    %v984 = vmax.f32 %v917, %v919
    %v985 = vmax.f32 %v923, %v925
    %v986 = vmax.f32 %v929, %v931
    %v987 = vmax.f32 %v935, %v937
    %v988 = vmax.f32 %v941, %v943
    %v989 = vmax.f32 %v947, %v949
    %v990 = vmax.f32 %v953, %v955
    %v991 = vmax.f32 %v959, %v961
    %v992 = vmax.f32 %v965, %v967
    %v993 = vmax.f32 %v969, %v970
    %v994 = vmax.f32 %v971, %v972
    %v995 = vmax.f32 %v973, %v974
    %v996 = vmax.f32 %v975, %v976
    %v997 = vmax.f32 %v977, %v978
    %v998 = vmax.f32 %v979, %v980
    %v999 = vmax.f32 %v981, %v982
    %v1000 = vmax.f32 %v983, %v984
    %v1001 = vmax.f32 %v985, %v986
    %v1002 = vmax.f32 %v987, %v988
    %v1003 = vmax.f32 %v989, %v990
    %v1004 = vmax.f32 %v991, %v992
    %v1005 = vmax.f32 %v993, 0.0
    %v1006 = vmax.f32 %v994, 0.0
    %v1007 = vmax.f32 %v995, 0.0
    %v1008 = vmax.f32 %v996, 0.0
    %v1009 = vmax.f32 %v997, 0.0
    %v1010 = vmax.f32 %v998, 0.0
    %v1011 = vmax.f32 %v999, 0.0
    %v1012 = vmax.f32 %v1000, 0.0
    %v1013 = vmax.f32 %v1001, 0.0
    %v1014 = vmax.f32 %v1002, 0.0
    %v1015 = vmax.f32 %v1003, 0.0
    %v1016 = vmax.f32 %v1004, 0.0
    %v1017 = vld [vmem:[#allocation4] sm:$0xff]
    %v1018 = vld [vmem:[#allocation4 + $0x8] sm:$0xff]
    %v1019 = vld [vmem:[#allocation4 + $0x10] sm:$0xff]
    %v1020 = vld [vmem:[#allocation4 + $0x18] sm:$0xff]
    %v1021 = vld [vmem:[#allocation4 + $0x20] sm:$0xff]
    %v1022 = vld [vmem:[#allocation4 + $0x28] sm:$0xff]
    %v1023 = vld [vmem:[#allocation4 + $0x30] sm:$0xff]
    %v1024 = vld [vmem:[#allocation4 + $0x38] sm:$0xff]
    %v1025 = vld [vmem:[#allocation4 + $0x40] sm:$0xff]
    %v1026 = vld [vmem:[#allocation4 + $0x48] sm:$0xff]
    %v1027 = vld [vmem:[#allocation4 + $0x50] sm:$0xff]
    %v1028 = vld [vmem:[#allocation4 + $0x58] sm:$0xff]
    %v1029 = vld [vmem:[#allocation4 + $0x60] sm:$0xff]
    %v1030 = vld [vmem:[#allocation4 + $0x68] sm:$0xff]
    %v1031 = vld [vmem:[#allocation4 + $0x70] sm:$0xff]
    %v1032 = vld [vmem:[#allocation4 + $0x78] sm:$0xff]
    %v1033 = vld [vmem:[#allocation4 + $0x80] sm:$0xff]
    %v1034 = vld [vmem:[#allocation4 + $0x88] sm:$0xff]
    %v1035 = vld [vmem:[#allocation4 + $0x90] sm:$0xff]
    %v1036 = vld [vmem:[#allocation4 + $0x98] sm:$0xff]
    %v1037 = vld [vmem:[#allocation4 + $0xa0] sm:$0xff]
    %v1038 = vld [vmem:[#allocation4 + $0xa8] sm:$0xff]
    %v1039 = vld [vmem:[#allocation4 + $0xb0] sm:$0xff]
    %v1040 = vld [vmem:[#allocation4 + $0xb8] sm:$0xff]
    %v1041 = vld [vmem:[#allocation4 + $0xc0] sm:$0xff]
    %v1042 = vld [vmem:[#allocation4 + $0xc8] sm:$0xff]
    %v1043 = vld [vmem:[#allocation4 + $0xd0] sm:$0xff]
    %v1044 = vld [vmem:[#allocation4 + $0xd8] sm:$0xff]
    %v1045 = vld [vmem:[#allocation4 + $0xe0] sm:$0xff]
    %v1046 = vld [vmem:[#allocation4 + $0xe8] sm:$0xff]
    %v1047 = vld [vmem:[#allocation4 + $0xf0] sm:$0xff]
    %v1048 = vld [vmem:[#allocation4 + $0xf8] sm:$0xff]
    %v1049 = vld [vmem:[#allocation4 + $0x100] sm:$0xff]
    %v1050 = vld [vmem:[#allocation4 + $0x108] sm:$0xff]
    %v1051 = vld [vmem:[#allocation4 + $0x110] sm:$0xff]
    %v1052 = vld [vmem:[#allocation4 + $0x118] sm:$0xff]
    %v1053 = vld [vmem:[#allocation4 + $0x120] sm:$0xff]
    %v1054 = vld [vmem:[#allocation4 + $0x128] sm:$0xff]
    %v1055 = vld [vmem:[#allocation4 + $0x130] sm:$0xff]
    %v1056 = vld [vmem:[#allocation4 + $0x138] sm:$0xff]
    %v1057 = vld [vmem:[#allocation4 + $0x140] sm:$0xff]
    %v1058 = vld [vmem:[#allocation4 + $0x148] sm:$0xff]
    %v1059 = vld [vmem:[#allocation4 + $0x150] sm:$0xff]
    %v1060 = vld [vmem:[#allocation4 + $0x158] sm:$0xff]
    %v1061 = vld [vmem:[#allocation4 + $0x160] sm:$0xff]
    %v1062 = vld [vmem:[#allocation4 + $0x168] sm:$0xff]
    %v1063 = vld [vmem:[#allocation4 + $0x170] sm:$0xff]
    %v1064 = vld [vmem:[#allocation4 + $0x178] sm:$0xff]
    %v1065 = vld [vmem:[#allocation4 + $0x180] sm:$0xff]
    %v1066 = vld [vmem:[#allocation4 + $0x188] sm:$0xff]
    %v1067 = vld [vmem:[#allocation4 + $0x190] sm:$0xff]
    %v1068 = vld [vmem:[#allocation4 + $0x198] sm:$0xff]
    %v1069 = vld [vmem:[#allocation4 + $0x1a0] sm:$0xff]
    %v1070 = vld [vmem:[#allocation4 + $0x1a8] sm:$0xff]
    %v1071 = vld [vmem:[#allocation4 + $0x1b0] sm:$0xff]
    %v1072 = vld [vmem:[#allocation4 + $0x1b8] sm:$0xff]
    %v1073 = vld [vmem:[#allocation4 + $0x1c0] sm:$0xff]
    %v1074 = vld [vmem:[#allocation4 + $0x1c8] sm:$0xff]
    %v1075 = vld [vmem:[#allocation4 + $0x1d0] sm:$0xff]
    %v1076 = vld [vmem:[#allocation4 + $0x1d8] sm:$0xff]
    %v1077 = vld [vmem:[#allocation4 + $0x1e0] sm:$0xff]
    %v1078 = vld [vmem:[#allocation4 + $0x1e8] sm:$0xff]
    %v1079 = vld [vmem:[#allocation4 + $0x1f0] sm:$0xff]
    %v1080 = vld [vmem:[#allocation4 + $0x1f8] sm:$0xff]
    %v1081 = vld [vmem:[#allocation4 + $0x200] sm:$0xff]
    %v1082 = vld [vmem:[#allocation4 + $0x208] sm:$0xff]
    %v1083 = vld [vmem:[#allocation4 + $0x210] sm:$0xff]
    %v1084 = vld [vmem:[#allocation4 + $0x218] sm:$0xff]
    %v1085 = vld [vmem:[#allocation4 + $0x220] sm:$0xff]
    %v1086 = vld [vmem:[#allocation4 + $0x228] sm:$0xff]
    %v1087 = vld [vmem:[#allocation4 + $0x230] sm:$0xff]
    %v1088 = vld [vmem:[#allocation4 + $0x238] sm:$0xff]
    %v1089 = vld [vmem:[#allocation4 + $0x240] sm:$0xff]
    %v1090 = vld [vmem:[#allocation4 + $0x248] sm:$0xff]
    %v1091 = vld [vmem:[#allocation4 + $0x250] sm:$0xff]
    %v1092 = vld [vmem:[#allocation4 + $0x258] sm:$0xff]
    %v1093 = vld [vmem:[#allocation4 + $0x260] sm:$0xff]
    %v1094 = vld [vmem:[#allocation4 + $0x268] sm:$0xff]
    %v1095 = vld [vmem:[#allocation4 + $0x270] sm:$0xff]
    %v1096 = vld [vmem:[#allocation4 + $0x278] sm:$0xff]
    %v1097 = vld [vmem:[#allocation4 + $0x280] sm:$0xff]
    %v1098 = vld [vmem:[#allocation4 + $0x288] sm:$0xff]
    %v1099 = vld [vmem:[#allocation4 + $0x290] sm:$0xff]
    %v1100 = vld [vmem:[#allocation4 + $0x298] sm:$0xff]
    %v1101 = vld [vmem:[#allocation4 + $0x2a0] sm:$0xff]
    %v1102 = vld [vmem:[#allocation4 + $0x2a8] sm:$0xff]
    %v1103 = vld [vmem:[#allocation4 + $0x2b0] sm:$0xff]
    %v1104 = vld [vmem:[#allocation4 + $0x2b8] sm:$0xff]
    %v1105 = vld [vmem:[#allocation4 + $0x2c0] sm:$0xff]
    %v1106 = vld [vmem:[#allocation4 + $0x2c8] sm:$0xff]
    %v1107 = vld [vmem:[#allocation4 + $0x2d0] sm:$0xff]
    %v1108 = vld [vmem:[#allocation4 + $0x2d8] sm:$0xff]
    %v1109 = vld [vmem:[#allocation4 + $0x2e0] sm:$0xff]
    %v1110 = vld [vmem:[#allocation4 + $0x2e8] sm:$0xff]
    %v1111 = vld [vmem:[#allocation4 + $0x2f0] sm:$0xff]
    %v1112 = vld [vmem:[#allocation4 + $0x2f8] sm:$0xff]
    %v1113 = vld [vmem:[#allocation4 + $0x300] sm:$0xff]
    %v1114 = vld [vmem:[#allocation4 + $0x308] sm:$0xff]
    %v1115 = vld [vmem:[#allocation4 + $0x310] sm:$0xff]
    %v1116 = vld [vmem:[#allocation4 + $0x318] sm:$0xff]
    %v1117 = vld [vmem:[#allocation4 + $0x320] sm:$0xff]
    %v1118 = vld [vmem:[#allocation4 + $0x328] sm:$0xff]
    %v1119 = vld [vmem:[#allocation4 + $0x330] sm:$0xff]
    %v1120 = vld [vmem:[#allocation4 + $0x338] sm:$0xff]
    %v1121 = vld [vmem:[#allocation4 + $0x340] sm:$0xff]
    %v1122 = vld [vmem:[#allocation4 + $0x348] sm:$0xff]
    %v1123 = vld [vmem:[#allocation4 + $0x350] sm:$0xff]
    %v1124 = vld [vmem:[#allocation4 + $0x358] sm:$0xff]
    %v1125 = vld [vmem:[#allocation4 + $0x360] sm:$0xff]
    %v1126 = vld [vmem:[#allocation4 + $0x368] sm:$0xff]
    %v1127 = vld [vmem:[#allocation4 + $0x370] sm:$0xff]
    %v1128 = vld [vmem:[#allocation4 + $0x378] sm:$0xff]
    %v1129 = vld [vmem:[#allocation4 + $0x380] sm:$0xff]
    %v1130 = vld [vmem:[#allocation4 + $0x388] sm:$0xff]
    %v1131 = vld [vmem:[#allocation4 + $0x390] sm:$0xff]
    %v1132 = vld [vmem:[#allocation4 + $0x398] sm:$0xff]
    %v1133 = vld [vmem:[#allocation4 + $0x3a0] sm:$0xff]
    %v1134 = vld [vmem:[#allocation4 + $0x3a8] sm:$0xff]
    %v1135 = vld [vmem:[#allocation4 + $0x3b0] sm:$0xff]
    %v1136 = vld [vmem:[#allocation4 + $0x3b8] sm:$0xff]
    %v1137 = vld [vmem:[#allocation4 + $0x3c0] sm:$0xff]
    %v1138 = vld [vmem:[#allocation4 + $0x3c8] sm:$0xff]
    %v1139 = vld [vmem:[#allocation4 + $0x3d0] sm:$0xff]
    %v1140 = vld [vmem:[#allocation4 + $0x3d8] sm:$0xff]
    %v1141 = vld [vmem:[#allocation4 + $0x3e0] sm:$0xff]
    %v1142 = vld [vmem:[#allocation4 + $0x3e8] sm:$0xff]
    %v1143 = vld [vmem:[#allocation4 + $0x3f0] sm:$0xff]
    %v1144 = vld [vmem:[#allocation4 + $0x3f8] sm:$0xff]
    %v1145 = vld [vmem:[#allocation4 + $0x400] sm:$0xff]
    %v1146 = vld [vmem:[#allocation4 + $0x408] sm:$0xff]
    %v1147 = vld [vmem:[#allocation4 + $0x410] sm:$0xff]
    %v1148 = vld [vmem:[#allocation4 + $0x418] sm:$0xff]
    %v1149 = vld [vmem:[#allocation4 + $0x420] sm:$0xff]
    %v1150 = vld [vmem:[#allocation4 + $0x428] sm:$0xff]
    %v1151 = vld [vmem:[#allocation4 + $0x430] sm:$0xff]
    %v1152 = vld [vmem:[#allocation4 + $0x438] sm:$0xff]
    %v1153 = vld [vmem:[#allocation4 + $0x440] sm:$0xff]
    %v1154 = vld [vmem:[#allocation4 + $0x448] sm:$0xff]
    %v1155 = vld [vmem:[#allocation4 + $0x450] sm:$0xff]
    %v1156 = vld [vmem:[#allocation4 + $0x458] sm:$0xff]
    %v1157 = vld [vmem:[#allocation4 + $0x460] sm:$0xff]
    %v1158 = vld [vmem:[#allocation4 + $0x468] sm:$0xff]
    %v1159 = vld [vmem:[#allocation4 + $0x470] sm:$0xff]
    %v1160 = vld [vmem:[#allocation4 + $0x478] sm:$0xff]
    %v1161 = vld [vmem:[#allocation4 + $0x480] sm:$0xff]
    %v1162 = vld [vmem:[#allocation4 + $0x488] sm:$0xff]
    %v1163 = vld [vmem:[#allocation4 + $0x490] sm:$0xff]
    %v1164 = vld [vmem:[#allocation4 + $0x498] sm:$0xff]
    %v1165 = vld [vmem:[#allocation4 + $0x4a0] sm:$0xff]
    %v1166 = vld [vmem:[#allocation4 + $0x4a8] sm:$0xff]
    %v1167 = vld [vmem:[#allocation4 + $0x4b0] sm:$0xff]
    %v1168 = vld [vmem:[#allocation4 + $0x4b8] sm:$0xff]
    %v1169 = vld [vmem:[#allocation4 + $0x4c0] sm:$0xff]
    %v1170 = vld [vmem:[#allocation4 + $0x4c8] sm:$0xff]
    %v1171 = vld [vmem:[#allocation4 + $0x4d0] sm:$0xff]
    %v1172 = vld [vmem:[#allocation4 + $0x4d8] sm:$0xff]
    %v1173 = vld [vmem:[#allocation4 + $0x4e0] sm:$0xff]
    %v1174 = vld [vmem:[#allocation4 + $0x4e8] sm:$0xff]
    %v1175 = vld [vmem:[#allocation4 + $0x4f0] sm:$0xff]
    %v1176 = vld [vmem:[#allocation4 + $0x4f8] sm:$0xff]
    %v1177 = vld [vmem:[%s5] sm:$0x3]
    %v1179 = vlaneseq
    %v1180 = vshrl.u32 %v1179, 7
    %v1181 = vsub.s32 0, %v1180
    %v1182 = vrot.slane %v1177, %v1181
    %v1183 = vlaneseq
    %v1184 = vshrl.u32 %v1183, 7
    %v1185 = vsub.s32 1, %v1184
    %v1186 = vrot.slane %v1177, %v1185
    %1189 = vmatprep.subr.mxu0 %v1048
    %1190 = vmatpush1.msra.mxu0 %v1047
    %1191 = vmatprep.subr.mxu0 %v1046
    %1192 = vmatpush1.msra.mxu0 %v1045
    %1193 = vmatprep.subr.mxu0 %v1044
    %1194 = vmatpush1.msra.mxu0 %v1043
    %1195 = vmatprep.subr.mxu0 %v1042
    %1196 = vmatpush1.msra.mxu0 %v1041
    %1197 = vmatprep.subr.mxu0 %v1040
    %1198 = vmatpush1.msra.mxu0 %v1039
    %1199 = vmatprep.subr.mxu0 %v1038
    %1200 = vmatpush1.msra.mxu0 %v1037
    %1201 = vmatprep.subr.mxu0 %v1036
    %1202 = vmatpush1.msra.mxu0 %v1035
    %1203 = vmatprep.subr.mxu0 %v1034
    %1204 = vmatpush1.msra.mxu0 %v1033
    %1205 = vmatprep.subr.mxu0 %v1032
    %1206 = vmatpush1.msra.mxu0 %v1031
    %1207 = vmatprep.subr.mxu0 %v1030
    %1208 = vmatpush1.msra.mxu0 %v1029
    %1209 = vmatprep.subr.mxu0 %v1028
    %1210 = vmatpush1.msra.mxu0 %v1027
    %1211 = vmatprep.subr.mxu0 %v1026
    %1212 = vmatpush1.msra.mxu0 %v1025
    %1213 = vmatprep.subr.mxu0 %v1024
    %1214 = vmatpush1.msra.mxu0 %v1023
    %1215 = vmatprep.subr.mxu0 %v1022
    %1216 = vmatpush1.msra.mxu0 %v1021
    %1217 = vmatprep.subr.mxu0 %v1020
    %1218 = vmatpush1.msra.mxu0 %v1019
    %1219 = vmatprep.subr.mxu0 %v1018
    %1220 = vmatpush1.msra.mxu0 %v1017
    %1221 = vmatprep.subr.mxu0 %v1080
    %1222 = vmatpush2.msra.mxu0 %v1079
    %1223 = vmatprep.subr.mxu0 %v1078
    %1224 = vmatpush2.msra.mxu0 %v1077
    %1225 = vmatprep.subr.mxu0 %v1076
    %1226 = vmatpush2.msra.mxu0 %v1075
    %1227 = vmatprep.subr.mxu0 %v1074
    %1228 = vmatpush2.msra.mxu0 %v1073
    %1229 = vmatprep.subr.mxu0 %v1072
    %1230 = vmatpush2.msra.mxu0 %v1071
    %1231 = vmatprep.subr.mxu0 %v1070
    %1232 = vmatpush2.msra.mxu0 %v1069
    %1233 = vmatprep.subr.mxu0 %v1068
    %1234 = vmatpush2.msra.mxu0 %v1067
    %1235 = vmatprep.subr.mxu0 %v1066
    %1236 = vmatpush2.msra.mxu0 %v1065
    %1237 = vmatprep.subr.mxu0 %v1064
    %1238 = vmatpush2.msra.mxu0 %v1063
    %1239 = vmatprep.subr.mxu0 %v1062
    %1240 = vmatpush2.msra.mxu0 %v1061
    %1241 = vmatprep.subr.mxu0 %v1060
    %1242 = vmatpush2.msra.mxu0 %v1059
    %1243 = vmatprep.subr.mxu0 %v1058
    %1244 = vmatpush2.msra.mxu0 %v1057
    %1245 = vmatprep.subr.mxu0 %v1056
    %1246 = vmatpush2.msra.mxu0 %v1055
    %1247 = vmatprep.subr.mxu0 %v1054
    %1248 = vmatpush2.msra.mxu0 %v1053
    %1249 = vmatprep.subr.mxu0 %v1052
    %1250 = vmatpush2.msra.mxu0 %v1051
    %1251 = vmatprep.subr.mxu0 %v1050
    %1252 = vmatpush2.msra.mxu0 %v1049
    %1253 = vmatprep.mubr.f32.mxu0 %v1006
    %1254 = vmatmul.mubr.f32.gmra.mxu0 %v1005
    %v1255 = vpop.f32.mrf.mxu0
    %v1256 = vadd.f32 %v1182, %v1255
    %v1257 = vpop.f32.mrf.mxu0
    %v1258 = vadd.f32 %v1186, %v1257
    %1259 = vmatprep.mubr.f32.mxu0 %v1007
    %1260 = vmatmul.mubr.f32.gmra.mxu0 %v1006
    %v1261 = vpop.f32.mrf.mxu0
    %v1262 = vadd.f32 %v1182, %v1261
    %v1263 = vpop.f32.mrf.mxu0
    %v1264 = vadd.f32 %v1186, %v1263
    %1265 = vmatprep.mubr.f32.mxu0 %v1008
    %1266 = vmatmul.mubr.f32.gmra.mxu0 %v1007
    %v1267 = vpop.f32.mrf.mxu0
    %v1268 = vadd.f32 %v1182, %v1267
    %v1269 = vpop.f32.mrf.mxu0
    %v1270 = vadd.f32 %v1186, %v1269
    %1271 = vmatprep.mubr.f32.mxu0 %v1009
    %1272 = vmatmul.mubr.f32.gmra.mxu0 %v1008
    %v1273 = vpop.f32.mrf.mxu0
    %v1274 = vadd.f32 %v1182, %v1273
    %v1275 = vpop.f32.mrf.mxu0
    %v1276 = vadd.f32 %v1186, %v1275
    %1277 = vmatprep.mubr.f32.mxu0 %v1010
    %1278 = vmatmul.mubr.f32.gmra.mxu0 %v1009
    %v1279 = vpop.f32.mrf.mxu0
    %v1280 = vadd.f32 %v1182, %v1279
    %v1281 = vpop.f32.mrf.mxu0
    %v1282 = vadd.f32 %v1186, %v1281
    %1283 = vmatprep.mubr.f32.mxu0 %v1011
    %1284 = vmatmul.mubr.f32.gmra.mxu0 %v1010
    %v1285 = vpop.f32.mrf.mxu0
    %v1286 = vadd.f32 %v1182, %v1285
    %v1287 = vpop.f32.mrf.mxu0
    %v1288 = vadd.f32 %v1186, %v1287
    %1289 = vmatprep.mubr.f32.mxu0 %v1012
    %1290 = vmatmul.mubr.f32.gmra.mxu0 %v1011
    %v1291 = vpop.f32.mrf.mxu0
    %v1292 = vadd.f32 %v1182, %v1291
    %v1293 = vpop.f32.mrf.mxu0
    %v1294 = vadd.f32 %v1186, %v1293
    %1295 = vmatprep.mubr.f32.mxu0 %v1013
    %1296 = vmatmul.mubr.f32.gmra.mxu0 %v1012
    %v1297 = vpop.f32.mrf.mxu0
    %v1298 = vadd.f32 %v1182, %v1297
    %v1299 = vpop.f32.mrf.mxu0
    %v1300 = vadd.f32 %v1186, %v1299
    %1301 = vdwg.mxu0
    %1302 = vmatprep.subr.mxu0 %v1112
    %1303 = vmatpush1.msra.mxu0 %v1111
    %1304 = vmatprep.subr.mxu0 %v1110
    %1305 = vmatpush1.msra.mxu0 %v1109
    %1306 = vmatprep.subr.mxu0 %v1108
    %1307 = vmatpush1.msra.mxu0 %v1107
    %1308 = vmatprep.subr.mxu0 %v1106
    %1309 = vmatpush1.msra.mxu0 %v1105
    %1310 = vmatprep.subr.mxu0 %v1104
    %1311 = vmatpush1.msra.mxu0 %v1103
    %1312 = vmatprep.subr.mxu0 %v1102
    %1313 = vmatpush1.msra.mxu0 %v1101
    %1314 = vmatprep.subr.mxu0 %v1100
    %1315 = vmatpush1.msra.mxu0 %v1099
    %1316 = vmatprep.subr.mxu0 %v1098
    %1317 = vmatpush1.msra.mxu0 %v1097
    %1318 = vmatprep.subr.mxu0 %v1096
    %1319 = vmatpush1.msra.mxu0 %v1095
    %1320 = vmatprep.subr.mxu0 %v1094
    %1321 = vmatpush1.msra.mxu0 %v1093
    %1322 = vmatprep.subr.mxu0 %v1092
    %1323 = vmatpush1.msra.mxu0 %v1091
    %1324 = vmatprep.subr.mxu0 %v1090
    %1325 = vmatpush1.msra.mxu0 %v1089
    %1326 = vmatprep.subr.mxu0 %v1088
    %1327 = vmatpush1.msra.mxu0 %v1087
    %1328 = vmatprep.subr.mxu0 %v1086
    %1329 = vmatpush1.msra.mxu0 %v1085
    %1330 = vmatprep.subr.mxu0 %v1084
    %1331 = vmatpush1.msra.mxu0 %v1083
    %1332 = vmatprep.subr.mxu0 %v1082
    %1333 = vmatpush1.msra.mxu0 %v1081
    %1334 = vmatprep.subr.mxu0 %v1144
    %1335 = vmatpush2.msra.mxu0 %v1143
    %1336 = vmatprep.subr.mxu0 %v1142
    %1337 = vmatpush2.msra.mxu0 %v1141
    %1338 = vmatprep.subr.mxu0 %v1140
    %1339 = vmatpush2.msra.mxu0 %v1139
    %1340 = vmatprep.subr.mxu0 %v1138
    %1341 = vmatpush2.msra.mxu0 %v1137
    %1342 = vmatprep.subr.mxu0 %v1136
    %1343 = vmatpush2.msra.mxu0 %v1135
    %1344 = vmatprep.subr.mxu0 %v1134
    %1345 = vmatpush2.msra.mxu0 %v1133
    %1346 = vmatprep.subr.mxu0 %v1132
    %1347 = vmatpush2.msra.mxu0 %v1131
    %1348 = vmatprep.subr.mxu0 %v1130
    %1349 = vmatpush2.msra.mxu0 %v1129
    %1350 = vmatprep.subr.mxu0 %v1128
    %1351 = vmatpush2.msra.mxu0 %v1127
    %1352 = vmatprep.subr.mxu0 %v1126
    %1353 = vmatpush2.msra.mxu0 %v1125
    %1354 = vmatprep.subr.mxu0 %v1124
    %1355 = vmatpush2.msra.mxu0 %v1123
    %1356 = vmatprep.subr.mxu0 %v1122
    %1357 = vmatpush2.msra.mxu0 %v1121
    %1358 = vmatprep.subr.mxu0 %v1120
    %1359 = vmatpush2.msra.mxu0 %v1119
    %1360 = vmatprep.subr.mxu0 %v1118
    %1361 = vmatpush2.msra.mxu0 %v1117
    %1362 = vmatprep.subr.mxu0 %v1116
    %1363 = vmatpush2.msra.mxu0 %v1115
    %1364 = vmatprep.subr.mxu0 %v1114
    %1365 = vmatpush2.msra.mxu0 %v1113
    %1366 = vmatprep.mubr.f32.mxu0 %v1008
    %1367 = vmatmul.mubr.f32.gmra.mxu0 %v1007
    %v1368 = vpop.f32.mrf.mxu0
    %v1369 = vadd.f32 %v1256, %v1368
    %v1370 = vpop.f32.mrf.mxu0
    %v1371 = vadd.f32 %v1258, %v1370
    %1372 = vmatprep.mubr.f32.mxu0 %v1009
    %1373 = vmatmul.mubr.f32.gmra.mxu0 %v1008
    %v1374 = vpop.f32.mrf.mxu0
    %v1375 = vadd.f32 %v1262, %v1374
    %v1376 = vpop.f32.mrf.mxu0
    %v1377 = vadd.f32 %v1264, %v1376
    %1378 = vmatprep.mubr.f32.mxu0 %v1010
    %1379 = vmatmul.mubr.f32.gmra.mxu0 %v1009
    %v1380 = vpop.f32.mrf.mxu0
    %v1381 = vadd.f32 %v1268, %v1380
    %v1382 = vpop.f32.mrf.mxu0
    %v1383 = vadd.f32 %v1270, %v1382
    %1384 = vmatprep.mubr.f32.mxu0 %v1011
    %1385 = vmatmul.mubr.f32.gmra.mxu0 %v1010
    %v1386 = vpop.f32.mrf.mxu0
    %v1387 = vadd.f32 %v1274, %v1386
    %v1388 = vpop.f32.mrf.mxu0
    %v1389 = vadd.f32 %v1276, %v1388
    %1390 = vmatprep.mubr.f32.mxu0 %v1012
    %1391 = vmatmul.mubr.f32.gmra.mxu0 %v1011
    %v1392 = vpop.f32.mrf.mxu0
    %v1393 = vadd.f32 %v1280, %v1392
    %v1394 = vpop.f32.mrf.mxu0
    %v1395 = vadd.f32 %v1282, %v1394
    %1396 = vmatprep.mubr.f32.mxu0 %v1013
    %1397 = vmatmul.mubr.f32.gmra.mxu0 %v1012
    %v1398 = vpop.f32.mrf.mxu0
    %v1399 = vadd.f32 %v1286, %v1398
    %v1400 = vpop.f32.mrf.mxu0
    %v1401 = vadd.f32 %v1288, %v1400
    %1402 = vmatprep.mubr.f32.mxu0 %v1014
    %1403 = vmatmul.mubr.f32.gmra.mxu0 %v1013
    %v1404 = vpop.f32.mrf.mxu0
    %v1405 = vadd.f32 %v1292, %v1404
    %v1406 = vpop.f32.mrf.mxu0
    %v1407 = vadd.f32 %v1294, %v1406
    %1408 = vmatprep.mubr.f32.mxu0 %v1015
    %1409 = vmatmul.mubr.f32.gmra.mxu0 %v1014
    %v1410 = vpop.f32.mrf.mxu0
    %v1411 = vadd.f32 %v1298, %v1410
    %v1412 = vpop.f32.mrf.mxu0
    %v1413 = vadd.f32 %v1300, %v1412
    %1414 = vdwg.mxu0
    %1415 = vmatprep.subr.mxu0 %v1176
    %1416 = vmatpush1.msra.mxu0 %v1175
    %1417 = vmatprep.subr.mxu0 %v1174
    %1418 = vmatpush1.msra.mxu0 %v1173
    %1419 = vmatprep.subr.mxu0 %v1172
    %1420 = vmatpush1.msra.mxu0 %v1171
    %1421 = vmatprep.subr.mxu0 %v1170
    %1422 = vmatpush1.msra.mxu0 %v1169
    %1423 = vmatprep.subr.mxu0 %v1168
    %1424 = vmatpush1.msra.mxu0 %v1167
    %1425 = vmatprep.subr.mxu0 %v1166
    %1426 = vmatpush1.msra.mxu0 %v1165
    %1427 = vmatprep.subr.mxu0 %v1164
    %1428 = vmatpush1.msra.mxu0 %v1163
    %1429 = vmatprep.subr.mxu0 %v1162
    %1430 = vmatpush1.msra.mxu0 %v1161
    %1431 = vmatprep.subr.mxu0 %v1160
    %1432 = vmatpush1.msra.mxu0 %v1159
    %1433 = vmatprep.subr.mxu0 %v1158
    %1434 = vmatpush1.msra.mxu0 %v1157
    %1435 = vmatprep.subr.mxu0 %v1156
    %1436 = vmatpush1.msra.mxu0 %v1155
    %1437 = vmatprep.subr.mxu0 %v1154
    %1438 = vmatpush1.msra.mxu0 %v1153
    %1439 = vmatprep.subr.mxu0 %v1152
    %1440 = vmatpush1.msra.mxu0 %v1151
    %1441 = vmatprep.subr.mxu0 %v1150
    %1442 = vmatpush1.msra.mxu0 %v1149
    %1443 = vmatprep.subr.mxu0 %v1148
    %1444 = vmatpush1.msra.mxu0 %v1147
    %1445 = vmatprep.subr.mxu0 %v1146
    %1446 = vmatpush1.msra.mxu0 %v1145
    %1447 = vmatprep.subr.mxu0 0.0
    %1448 = vmatpush2.msra.mxu0 0.0
    %1449 = vmatprep.subr.mxu0 0.0
    %1450 = vmatpush2.msra.mxu0 0.0
    %1451 = vmatprep.subr.mxu0 0.0
    %1452 = vmatpush2.msra.mxu0 0.0
    %1453 = vmatprep.subr.mxu0 0.0
    %1454 = vmatpush2.msra.mxu0 0.0
    %1455 = vmatprep.subr.mxu0 0.0
    %1456 = vmatpush2.msra.mxu0 0.0
    %1457 = vmatprep.subr.mxu0 0.0
    %1458 = vmatpush2.msra.mxu0 0.0
    %1459 = vmatprep.subr.mxu0 0.0
    %1460 = vmatpush2.msra.mxu0 0.0
    %1461 = vmatprep.subr.mxu0 0.0
    %1462 = vmatpush2.msra.mxu0 0.0
    %1463 = vmatprep.subr.mxu0 0.0
    %1464 = vmatpush2.msra.mxu0 0.0
    %1465 = vmatprep.subr.mxu0 0.0
    %1466 = vmatpush2.msra.mxu0 0.0
    %1467 = vmatprep.subr.mxu0 0.0
    %1468 = vmatpush2.msra.mxu0 0.0
    %1469 = vmatprep.subr.mxu0 0.0
    %1470 = vmatpush2.msra.mxu0 0.0
    %1471 = vmatprep.subr.mxu0 0.0
    %1472 = vmatpush2.msra.mxu0 0.0
    %1473 = vmatprep.subr.mxu0 0.0
    %1474 = vmatpush2.msra.mxu0 0.0
    %1475 = vmatprep.subr.mxu0 0.0
    %1476 = vmatpush2.msra.mxu0 0.0
    %1477 = vmatprep.subr.mxu0 0.0
    %1478 = vmatpush2.msra.mxu0 0.0
    %1479 = vmatprep.mubr.f32.mxu0 0.0
    %1480 = vmatmul.mubr.f32.gmra.mxu0 %v1009
    %v1481 = vpop.f32.mrf.mxu0
    %v1482 = vadd.f32 %v1369, %v1481
    %v1483 = vpop.f32.mrf.mxu0
    %v1484 = vadd.f32 %v1371, %v1483
    %1485 = vmatprep.mubr.f32.mxu0 0.0
    %1486 = vmatmul.mubr.f32.gmra.mxu0 %v1010
    %v1487 = vpop.f32.mrf.mxu0
    %v1488 = vadd.f32 %v1375, %v1487
    %v1489 = vpop.f32.mrf.mxu0
    %v1490 = vadd.f32 %v1377, %v1489
    %1491 = vmatprep.mubr.f32.mxu0 0.0
    %1492 = vmatmul.mubr.f32.gmra.mxu0 %v1011
    %v1493 = vpop.f32.mrf.mxu0
    %v1494 = vadd.f32 %v1381, %v1493
    %v1495 = vpop.f32.mrf.mxu0
    %v1496 = vadd.f32 %v1383, %v1495
    %1497 = vmatprep.mubr.f32.mxu0 0.0
    %1498 = vmatmul.mubr.f32.gmra.mxu0 %v1012
    %v1499 = vpop.f32.mrf.mxu0
    %v1500 = vadd.f32 %v1387, %v1499
    %v1501 = vpop.f32.mrf.mxu0
    %v1502 = vadd.f32 %v1389, %v1501
    %1503 = vmatprep.mubr.f32.mxu0 0.0
    %1504 = vmatmul.mubr.f32.gmra.mxu0 %v1013
    %v1505 = vpop.f32.mrf.mxu0
    %v1506 = vadd.f32 %v1393, %v1505
    %v1507 = vpop.f32.mrf.mxu0
    %v1508 = vadd.f32 %v1395, %v1507
    %1509 = vmatprep.mubr.f32.mxu0 0.0
    %1510 = vmatmul.mubr.f32.gmra.mxu0 %v1014
    %v1511 = vpop.f32.mrf.mxu0
    %v1512 = vadd.f32 %v1399, %v1511
    %v1513 = vpop.f32.mrf.mxu0
    %v1514 = vadd.f32 %v1401, %v1513
    %1515 = vmatprep.mubr.f32.mxu0 0.0
    %1516 = vmatmul.mubr.f32.gmra.mxu0 %v1015
    %v1517 = vpop.f32.mrf.mxu0
    %v1518 = vadd.f32 %v1405, %v1517
    %v1519 = vpop.f32.mrf.mxu0
    %v1520 = vadd.f32 %v1407, %v1519
    %1521 = vmatprep.mubr.f32.mxu0 0.0
    %1522 = vmatmul.mubr.f32.gmra.mxu0 %v1016
    %v1523 = vpop.f32.mrf.mxu0
    %v1524 = vadd.f32 %v1411, %v1523
    %v1525 = vpop.f32.mrf.mxu0
    %v1526 = vadd.f32 %v1413, %v1525
    %1527 = vdwg.mxu0
    %v1528 = vmax.f32 %v1482, %v1484
    %v1529 = vmax.f32 %v1488, %v1490
    %v1530 = vmax.f32 %v1494, %v1496
    %v1531 = vmax.f32 %v1500, %v1502
    %v1532 = vmax.f32 %v1506, %v1508
    %v1533 = vmax.f32 %v1512, %v1514
    %v1534 = vmax.f32 %v1518, %v1520
    %v1535 = vmax.f32 %v1524, %v1526
    %v1536 = vmax.f32 %v1528, %v1529
    %v1537 = vmax.f32 %v1530, %v1531
    %v1538 = vmax.f32 %v1532, %v1533
    %v1539 = vmax.f32 %v1534, %v1535
    %v1540 = vmax.f32 %v1536, 0.0
    %v1541 = vmax.f32 %v1537, 0.0
    %v1542 = vmax.f32 %v1538, 0.0
    %v1543 = vmax.f32 %v1539, 0.0
    %v1544 = vld [vmem:[%s6] sm:$0xff]
    %v1545 = vld [vmem:[%s6 + $0x8] sm:$0xff]
    %v1546 = vld [vmem:[%s6 + $0x10] sm:$0xff]
    %v1547 = vld [vmem:[%s6 + $0x18] sm:$0xff]
    %v1548 = vld [vmem:[%s6 + $0x20] sm:$0xff]
    %v1549 = vld [vmem:[%s6 + $0x28] sm:$0xff]
    %v1550 = vld [vmem:[%s6 + $0x30] sm:$0xff]
    %v1551 = vld [vmem:[%s6 + $0x38] sm:$0xff]
    %v1552 = vld [vmem:[%s6 + $0x40] sm:$0xff]
    %v1553 = vld [vmem:[%s6 + $0x48] sm:$0xff]
    %v1554 = vld [vmem:[%s6 + $0x50] sm:$0xff]
    %v1555 = vld [vmem:[%s6 + $0x58] sm:$0xff]
    %v1556 = vld [vmem:[%s6 + $0x60] sm:$0xff]
    %v1557 = vld [vmem:[%s6 + $0x68] sm:$0xff]
    %v1558 = vld [vmem:[%s6 + $0x70] sm:$0xff]
    %v1559 = vld [vmem:[%s6 + $0x78] sm:$0xff]
    %v1560 = vld [vmem:[%s6 + $0x80] sm:$0xff]
    %v1561 = vld [vmem:[%s6 + $0x88] sm:$0xff]
    %v1562 = vld [vmem:[%s6 + $0x90] sm:$0xff]
    %v1563 = vld [vmem:[%s6 + $0x98] sm:$0xff]
    %v1564 = vld [vmem:[%s6 + $0xa0] sm:$0xff]
    %v1565 = vld [vmem:[%s6 + $0xa8] sm:$0xff]
    %v1566 = vld [vmem:[%s6 + $0xb0] sm:$0xff]
    %v1567 = vld [vmem:[%s6 + $0xb8] sm:$0xff]
    %v1568 = vld [vmem:[%s6 + $0xc0] sm:$0xff]
    %v1569 = vld [vmem:[%s6 + $0xc8] sm:$0xff]
    %v1570 = vld [vmem:[%s6 + $0xd0] sm:$0xff]
    %v1571 = vld [vmem:[%s6 + $0xd8] sm:$0xff]
    %v1572 = vld [vmem:[%s6 + $0xe0] sm:$0xff]
    %v1573 = vld [vmem:[%s6 + $0xe8] sm:$0xff]
    %v1574 = vld [vmem:[%s6 + $0xf0] sm:$0xff]
    %v1575 = vld [vmem:[%s6 + $0xf8] sm:$0xff]
    %v1576 = vld [vmem:[%s6 + $0x100] sm:$0xff]
    %v1577 = vld [vmem:[%s6 + $0x108] sm:$0xff]
    %v1578 = vld [vmem:[%s6 + $0x110] sm:$0xff]
    %v1579 = vld [vmem:[%s6 + $0x118] sm:$0xff]
    %v1580 = vld [vmem:[%s6 + $0x120] sm:$0xff]
    %v1581 = vld [vmem:[%s6 + $0x128] sm:$0xff]
    %v1582 = vld [vmem:[%s6 + $0x130] sm:$0xff]
    %v1583 = vld [vmem:[%s6 + $0x138] sm:$0xff]
    %v1584 = vld [vmem:[%s6 + $0x140] sm:$0xff]
    %v1585 = vld [vmem:[%s6 + $0x148] sm:$0xff]
    %v1586 = vld [vmem:[%s6 + $0x150] sm:$0xff]
    %v1587 = vld [vmem:[%s6 + $0x158] sm:$0xff]
    %v1588 = vld [vmem:[%s6 + $0x160] sm:$0xff]
    %v1589 = vld [vmem:[%s6 + $0x168] sm:$0xff]
    %v1590 = vld [vmem:[%s6 + $0x170] sm:$0xff]
    %v1591 = vld [vmem:[%s6 + $0x178] sm:$0xff]
    %v1592 = vld [vmem:[%s6 + $0x180] sm:$0xff]
    %v1593 = vld [vmem:[%s6 + $0x188] sm:$0xff]
    %v1594 = vld [vmem:[%s6 + $0x190] sm:$0xff]
    %v1595 = vld [vmem:[%s6 + $0x198] sm:$0xff]
    %v1596 = vld [vmem:[%s6 + $0x1a0] sm:$0xff]
    %v1597 = vld [vmem:[%s6 + $0x1a8] sm:$0xff]
    %v1598 = vld [vmem:[%s6 + $0x1b0] sm:$0xff]
    %v1599 = vld [vmem:[%s6 + $0x1b8] sm:$0xff]
    %v1600 = vld [vmem:[%s6 + $0x1c0] sm:$0xff]
    %v1601 = vld [vmem:[%s6 + $0x1c8] sm:$0xff]
    %v1602 = vld [vmem:[%s6 + $0x1d0] sm:$0xff]
    %v1603 = vld [vmem:[%s6 + $0x1d8] sm:$0xff]
    %v1604 = vld [vmem:[%s6 + $0x1e0] sm:$0xff]
    %v1605 = vld [vmem:[%s6 + $0x1e8] sm:$0xff]
    %v1606 = vld [vmem:[%s6 + $0x1f0] sm:$0xff]
    %v1607 = vld [vmem:[%s6 + $0x1f8] sm:$0xff]
    %v1608 = vld [vmem:[%s7] sm:$0x1]
    %v1610 = vlaneseq
    %v1611 = vshrl.u32 %v1610, 7
    %v1612 = vsub.s32 0, %v1611
    %v1613 = vrot.slane %v1608, %v1612
    %1615 = vmatprep.subr.mxu0 0.0
    %1616 = vmatpush1.msra.mxu0 %v1559
    %1617 = vmatprep.subr.mxu0 0.0
    %1618 = vmatpush1.msra.mxu0 %v1558
    %1619 = vmatprep.subr.mxu0 0.0
    %1620 = vmatpush1.msra.mxu0 %v1557
    %1621 = vmatprep.subr.mxu0 0.0
    %1622 = vmatpush1.msra.mxu0 %v1556
    %1623 = vmatprep.subr.mxu0 0.0
    %1624 = vmatpush1.msra.mxu0 %v1555
    %1625 = vmatprep.subr.mxu0 0.0
    %1626 = vmatpush1.msra.mxu0 %v1554
    %1627 = vmatprep.subr.mxu0 0.0
    %1628 = vmatpush1.msra.mxu0 %v1553
    %1629 = vmatprep.subr.mxu0 0.0
    %1630 = vmatpush1.msra.mxu0 %v1552
    %1631 = vmatprep.subr.mxu0 0.0
    %1632 = vmatpush1.msra.mxu0 %v1551
    %1633 = vmatprep.subr.mxu0 0.0
    %1634 = vmatpush1.msra.mxu0 %v1550
    %1635 = vmatprep.subr.mxu0 0.0
    %1636 = vmatpush1.msra.mxu0 %v1549
    %1637 = vmatprep.subr.mxu0 0.0
    %1638 = vmatpush1.msra.mxu0 %v1548
    %1639 = vmatprep.subr.mxu0 0.0
    %1640 = vmatpush1.msra.mxu0 %v1547
    %1641 = vmatprep.subr.mxu0 0.0
    %1642 = vmatpush1.msra.mxu0 %v1546
    %1643 = vmatprep.subr.mxu0 0.0
    %1644 = vmatpush1.msra.mxu0 %v1545
    %1645 = vmatprep.subr.mxu0 0.0
    %1646 = vmatpush1.msra.mxu0 %v1544
    %1647 = vmatprep.subr.mxu0 0.0
    %1648 = vmatpush2.msra.mxu0 %v1575
    %1649 = vmatprep.subr.mxu0 0.0
    %1650 = vmatpush2.msra.mxu0 %v1574
    %1651 = vmatprep.subr.mxu0 0.0
    %1652 = vmatpush2.msra.mxu0 %v1573
    %1653 = vmatprep.subr.mxu0 0.0
    %1654 = vmatpush2.msra.mxu0 %v1572
    %1655 = vmatprep.subr.mxu0 0.0
    %1656 = vmatpush2.msra.mxu0 %v1571
    %1657 = vmatprep.subr.mxu0 0.0
    %1658 = vmatpush2.msra.mxu0 %v1570
    %1659 = vmatprep.subr.mxu0 0.0
    %1660 = vmatpush2.msra.mxu0 %v1569
    %1661 = vmatprep.subr.mxu0 0.0
    %1662 = vmatpush2.msra.mxu0 %v1568
    %1663 = vmatprep.subr.mxu0 0.0
    %1664 = vmatpush2.msra.mxu0 %v1567
    %1665 = vmatprep.subr.mxu0 0.0
    %1666 = vmatpush2.msra.mxu0 %v1566
    %1667 = vmatprep.subr.mxu0 0.0
    %1668 = vmatpush2.msra.mxu0 %v1565
    %1669 = vmatprep.subr.mxu0 0.0
    %1670 = vmatpush2.msra.mxu0 %v1564
    %1671 = vmatprep.subr.mxu0 0.0
    %1672 = vmatpush2.msra.mxu0 %v1563
    %1673 = vmatprep.subr.mxu0 0.0
    %1674 = vmatpush2.msra.mxu0 %v1562
    %1675 = vmatprep.subr.mxu0 0.0
    %1676 = vmatpush2.msra.mxu0 %v1561
    %1677 = vmatprep.subr.mxu0 0.0
    %1678 = vmatpush2.msra.mxu0 %v1560
    %1679 = vmatprep.mubr.f32.mxu0 %v1541
    %1680 = vmatmul.mubr.f32.gmra.mxu0 %v1540
    %v1681 = vpop.f32.mrf.mxu0
    %v1682 = vadd.f32 %v1613, %v1681
    %v1683 = vpop.f32.mrf.mxu0
    %1684 = vdwg.mxu0
    %1685 = vmatprep.subr.mxu0 0.0
    %1686 = vmatpush1.msra.mxu0 %v1591
    %1687 = vmatprep.subr.mxu0 0.0
    %1688 = vmatpush1.msra.mxu0 %v1590
    %1689 = vmatprep.subr.mxu0 0.0
    %1690 = vmatpush1.msra.mxu0 %v1589
    %1691 = vmatprep.subr.mxu0 0.0
    %1692 = vmatpush1.msra.mxu0 %v1588
    %1693 = vmatprep.subr.mxu0 0.0
    %1694 = vmatpush1.msra.mxu0 %v1587
    %1695 = vmatprep.subr.mxu0 0.0
    %1696 = vmatpush1.msra.mxu0 %v1586
    %1697 = vmatprep.subr.mxu0 0.0
    %1698 = vmatpush1.msra.mxu0 %v1585
    %1699 = vmatprep.subr.mxu0 0.0
    %1700 = vmatpush1.msra.mxu0 %v1584
    %1701 = vmatprep.subr.mxu0 0.0
    %1702 = vmatpush1.msra.mxu0 %v1583
    %1703 = vmatprep.subr.mxu0 0.0
    %1704 = vmatpush1.msra.mxu0 %v1582
    %1705 = vmatprep.subr.mxu0 0.0
    %1706 = vmatpush1.msra.mxu0 %v1581
    %1707 = vmatprep.subr.mxu0 0.0
    %1708 = vmatpush1.msra.mxu0 %v1580
    %1709 = vmatprep.subr.mxu0 0.0
    %1710 = vmatpush1.msra.mxu0 %v1579
    %1711 = vmatprep.subr.mxu0 0.0
    %1712 = vmatpush1.msra.mxu0 %v1578
    %1713 = vmatprep.subr.mxu0 0.0
    %1714 = vmatpush1.msra.mxu0 %v1577
    %1715 = vmatprep.subr.mxu0 0.0
    %1716 = vmatpush1.msra.mxu0 %v1576
    %1717 = vmatprep.subr.mxu0 0.0
    %1718 = vmatpush2.msra.mxu0 %v1607
    %1719 = vmatprep.subr.mxu0 0.0
    %1720 = vmatpush2.msra.mxu0 %v1606
    %1721 = vmatprep.subr.mxu0 0.0
    %1722 = vmatpush2.msra.mxu0 %v1605
    %1723 = vmatprep.subr.mxu0 0.0
    %1724 = vmatpush2.msra.mxu0 %v1604
    %1725 = vmatprep.subr.mxu0 0.0
    %1726 = vmatpush2.msra.mxu0 %v1603
    %1727 = vmatprep.subr.mxu0 0.0
    %1728 = vmatpush2.msra.mxu0 %v1602
    %1729 = vmatprep.subr.mxu0 0.0
    %1730 = vmatpush2.msra.mxu0 %v1601
    %1731 = vmatprep.subr.mxu0 0.0
    %1732 = vmatpush2.msra.mxu0 %v1600
    %1733 = vmatprep.subr.mxu0 0.0
    %1734 = vmatpush2.msra.mxu0 %v1599
    %1735 = vmatprep.subr.mxu0 0.0
    %1736 = vmatpush2.msra.mxu0 %v1598
    %1737 = vmatprep.subr.mxu0 0.0
    %1738 = vmatpush2.msra.mxu0 %v1597
    %1739 = vmatprep.subr.mxu0 0.0
    %1740 = vmatpush2.msra.mxu0 %v1596
    %1741 = vmatprep.subr.mxu0 0.0
    %1742 = vmatpush2.msra.mxu0 %v1595
    %1743 = vmatprep.subr.mxu0 0.0
    %1744 = vmatpush2.msra.mxu0 %v1594
    %1745 = vmatprep.subr.mxu0 0.0
    %1746 = vmatpush2.msra.mxu0 %v1593
    %1747 = vmatprep.subr.mxu0 0.0
    %1748 = vmatpush2.msra.mxu0 %v1592
    %1749 = vmatprep.mubr.f32.mxu0 %v1543
    %1750 = vmatmul.mubr.f32.gmra.mxu0 %v1542
    %v1751 = vpop.f32.mrf.mxu0
    %v1752 = vadd.f32 %v1682, %v1751
    %v1753 = vpop.f32.mrf.mxu0
    %1754 = vdwg.mxu0
    %v1755 = vmax.f32 %v1752, 0.0
    %v1756 = vld [vmem:[%s8] sm:$0xff]
    %v1757 = vld [vmem:[%s8 + $0x8] sm:$0xff]
    %v1758 = vld [vmem:[%s8 + $0x10] sm:$0xff]
    %v1759 = vld [vmem:[%s8 + $0x18] sm:$0xff]
    %v1760 = vld [vmem:[%s8 + $0x20] sm:$0xff]
    %v1761 = vld [vmem:[%s8 + $0x28] sm:$0xff]
    %v1762 = vld [vmem:[%s8 + $0x30] sm:$0x3]
    %v1763 = vld [vmem:[%s9] sm:$0x1]
    %v1765 = vlaneseq
    %v1766 = vshrl.u32 %v1765, 7
    %v1767 = vsub.s32 0, %v1766
    %v1768 = vrot.slane %v1763, %v1767
    %vm1770 = vcmask 408576
    %v1772 = vsel %vm1770, %v1755, 0
    %vm1774 = vcmask 1041408
    %v1776 = vsel %vm1774, %v1762, 0
    %1778 = vmatprep.subr.mxu0 0.0
    %1779 = vmatpush1.msra.mxu0 0.0
    %1780 = vmatprep.subr.mxu0 0.0
    %1781 = vmatpush1.msra.mxu0 0.0
    %1782 = vmatprep.subr.mxu0 0.0
    %1783 = vmatpush1.msra.mxu0 0.0
    %1784 = vmatprep.subr.mxu0 0.0
    %1785 = vmatpush1.msra.mxu0 0.0
    %1786 = vmatprep.subr.mxu0 0.0
    %1787 = vmatpush1.msra.mxu0 0.0
    %1788 = vmatprep.subr.mxu0 0.0
    %1789 = vmatpush1.msra.mxu0 0.0
    %1790 = vmatprep.subr.mxu0 0.0
    %1791 = vmatpush1.msra.mxu0 0.0
    %1792 = vmatprep.subr.mxu0 0.0
    %1793 = vmatpush1.msra.mxu0 0.0
    %1794 = vmatprep.subr.mxu0 0.0
    %1795 = vmatpush1.msra.mxu0 0.0
    %1796 = vmatprep.subr.mxu0 0.0
    %1797 = vmatpush1.msra.mxu0 %v1776
    %1798 = vmatprep.subr.mxu0 0.0
    %1799 = vmatpush1.msra.mxu0 %v1761
    %1800 = vmatprep.subr.mxu0 0.0
    %1801 = vmatpush1.msra.mxu0 %v1760
    %1802 = vmatprep.subr.mxu0 0.0
    %1803 = vmatpush1.msra.mxu0 %v1759
    %1804 = vmatprep.subr.mxu0 0.0
    %1805 = vmatpush1.msra.mxu0 %v1758
    %1806 = vmatprep.subr.mxu0 0.0
    %1807 = vmatpush1.msra.mxu0 %v1757
    %1808 = vmatprep.subr.mxu0 0.0
    %1809 = vmatpush1.msra.mxu0 %v1756
    %1810 = vmatprep.subr.mxu0 0.0
    %1811 = vmatpush2.msra.mxu0 0.0
    %1812 = vmatprep.subr.mxu0 0.0
    %1813 = vmatpush2.msra.mxu0 0.0
    %1814 = vmatprep.subr.mxu0 0.0
    %1815 = vmatpush2.msra.mxu0 0.0
    %1816 = vmatprep.subr.mxu0 0.0
    %1817 = vmatpush2.msra.mxu0 0.0
    %1818 = vmatprep.subr.mxu0 0.0
    %1819 = vmatpush2.msra.mxu0 0.0
    %1820 = vmatprep.subr.mxu0 0.0
    %1821 = vmatpush2.msra.mxu0 0.0
    %1822 = vmatprep.subr.mxu0 0.0
    %1823 = vmatpush2.msra.mxu0 0.0
    %1824 = vmatprep.subr.mxu0 0.0
    %1825 = vmatpush2.msra.mxu0 0.0
    %1826 = vmatprep.subr.mxu0 0.0
    %1827 = vmatpush2.msra.mxu0 0.0
    %1828 = vmatprep.subr.mxu0 0.0
    %1829 = vmatpush2.msra.mxu0 0.0
    %1830 = vmatprep.subr.mxu0 0.0
    %1831 = vmatpush2.msra.mxu0 0.0
    %1832 = vmatprep.subr.mxu0 0.0
    %1833 = vmatpush2.msra.mxu0 0.0
    %1834 = vmatprep.subr.mxu0 0.0
    %1835 = vmatpush2.msra.mxu0 0.0
    %1836 = vmatprep.subr.mxu0 0.0
    %1837 = vmatpush2.msra.mxu0 0.0
    %1838 = vmatprep.subr.mxu0 0.0
    %1839 = vmatpush2.msra.mxu0 0.0
    %1840 = vmatprep.subr.mxu0 0.0
    %1841 = vmatpush2.msra.mxu0 0.0
    %1842 = vmatprep.mubr.f32.mxu0 0.0
    %1843 = vmatmul.mubr.f32.gmra.mxu0 %v1772
    %v1844 = vpop.f32.mrf.mxu0
    %v1845 = vadd.f32 %v1768, %v1844
    %v1846 = vpop.f32.mrf.mxu0
    %1847 = vdwg.mxu0
    %1848 = vmax.xlane.f32.xlu0 %v1845
    %v1849 = vpop.xlane.xlu0 %1848
    %v1850 = vsub.f32 %v1845, %v1849
    %v1851 = vmul.f32 %v1850, 1.442695
    %v1852 = vpow.pop %v1851
    %1853 = vadd.xlane.f32.xlu0 %v1852
    %v1854 = vpop.xlane.xlu0 %1853
    %v1855 = vlog2.pop %v1854
    %v1856 = vmul.f32 %v1855, 0.6931472
    %v1857 = vsub.f32 %v1850, %v1856
    %1858 = vst [vmem:[%s10] sm:$0xff] %v1857
    // Predicated region
    $region42: #{net_forward.1} parent=1 // pred_check
      _
    $region43: #{net_forward.1} parent=1 // pred_check_branch
      %1860 = sbr.rel (0) target = $region45
    $region44: #{net_forward.1} parent=1 // pred_region
      _
    $region45: #{net_forward.1} parent=1 // pred_fallthru
      _
    // Predicated region
    $region46: #{net_forward.1} parent=1 // pred_check
      _
    $region47: #{net_forward.1} parent=1 // pred_check_branch
      %1862 = sbr.rel (0) target = $region49
    $region48: #{net_forward.1} parent=1 // pred_region
      _
    $region49: #{net_forward.1} parent=1 // pred_fallthru
      _
    %1863 = vsyncpa [#allocation5], 1

</llo_original>
